<compile_context>
chip_gen: v6e
topology: v6e:2x2x1
jax: 0.10.0
libtpu: 0.0.40
codegen_flags: <defaults>
</compile_context>

<pallas_src>
import functools

import jax
import jax.numpy as jnp
from jax.experimental import pallas as pl
from jax.experimental.pallas import tpu as pltpu


def _round_up(n, m):
    return ((n + m - 1) // m) * m


# ------------------------- fused LSTM + MLP kernel ---------------------------

def fused_lstm_mlp_kernel(x_ref, wrec_ref, w1_ref, w2_ref, bias_ref, out_ref,
                          *, B, T, H, D, Pg, Pd):
    # x_ref:    (T*B, I_pad)  time-major rows (t*B + b), zero-padded features
    # wrec_ref: (I_pad+H, 4H) = [W_ih^T (zero-padded rows) ; W_hh^T]
    # w1_ref:   (T*H, D)      = W_fc1^T
    # w2_ref:   (D, C_pad)    = W_fc2^T zero-padded to 128 output lanes
    # bias_ref: (1, Pg+Pd+C_pad) = [b_ih+b_hh | b_fc1 | b_fc2], each segment
    #           zero-padded to a multiple of 128 lanes (aligned slices)
    # out_ref:  (B, C_pad)
    I_pad = x_ref.shape[1]
    C_pad = out_ref.shape[1]
    fourH = 4 * H

    wih = wrec_ref[0:I_pad, :]                 # (I_pad, 4H), sublane-aligned
    whh = wrec_ref[I_pad:I_pad + H, :]         # (H, 4H),     sublane-aligned
    b_gate = bias_ref[:, 0:fourH]              # (1, 4H)
    b_fc1 = bias_ref[:, Pg:Pg + D]             # (1, D)
    b_fc2 = bias_ref[:, Pg + Pd:Pg + Pd + C_pad]  # (1, C_pad)

    # --- Non-recurrent input projection, hoisted off the serial chain -------
    # One MXU matmul + one bias broadcast for all timesteps.
    gx = jnp.dot(x_ref[...], wih,
                 preferred_element_type=jnp.float32) + b_gate      # (T*B, 4H)

    w1 = w1_ref[...]                                               # (T*H, D)

    # --- Serial recurrence, fully unrolled (T small & static) ---------------
    hid = jnp.zeros((B, D), jnp.float32)   # fc1 accumulator (replaces scratch)
    c = jnp.zeros((B, H), jnp.float32)
    h = jnp.zeros((B, H), jnp.float32)
    for t in range(T):
        g_t = gx[t * B:(t + 1) * B, :]                             # (B, 4H)
        if t == 0:
            gates = g_t                        # h_{-1} == 0: skip zero matmul
        else:
            gates = g_t + jnp.dot(h, whh, preferred_element_type=jnp.float32)
        # Whole-vreg transcendentals (EUP slot otherwise idle); slice the
        # already-activated values.  PyTorch gate order: i, f, g, o.
        sg = jax.nn.sigmoid(gates)
        tg = jnp.tanh(gates)
        i_g = sg[:, 0:H]
        f_g = sg[:, H:2 * H]
        g_g = tg[:, 2 * H:3 * H]
        o_g = sg[:, 3 * H:4 * H]
        if t == 0:
            c = i_g * g_g                      # c_{-1} == 0: skip f*c
        else:
            c = f_g * c + i_g * g_g
        h = o_g * jnp.tanh(c)
        # fc1 folded into the loop: flattened h_t hits rows [t*H,(t+1)*H) of
        # W_fc1^T.  Partial matmul issues in idle MXU time of the recurrence.
        hid = hid + jnp.dot(h, w1[t * H:(t + 1) * H, :],
                            preferred_element_type=jnp.float32)

    # --- ReLU -> fc2 (lane-dense padded logits, unmasked final store) -------
    hid = jnp.maximum(hid + b_fc1, 0.0)
    y = jnp.dot(hid, w2_ref[...], preferred_element_type=jnp.float32) + b_fc2
    out_ref[...] = y.astype(out_ref.dtype)


# ------------------------------ full model -----------------------------------

def lstm_model2_forward(x, params):
    """x: (B, T, I) float32 -> logits (B, num_classes). Matches PyTorch LSTMModel2."""
    B, T, I = x.shape
    H = params["w_hh"].shape[1]
    D = params["w_fc1"].shape[0]
    C = params["w_fc2"].shape[0]
    fourH = 4 * H
    I_pad = _round_up(I, 8)          # sublane-align the W_ih^T / W_hh^T split
    C_pad = _round_up(C, 128)        # lane-dense final store, sliced below
    Pg = _round_up(fourH, 128)       # aligned bias segments
    Pd = _round_up(D, 128)

    # Time-major rows (t*B + b): per-step gate blocks are contiguous slices.
    x_tm = jnp.transpose(x, (1, 0, 2)).reshape(T * B, I)
    x_tm = jnp.pad(x_tm, ((0, 0), (0, I_pad - I)))                  # (T*B, I_pad)

    # Pack recurrent weights into one input (fewer DMA descriptors).
    wih_t = jnp.pad(params["w_ih"].T, ((0, I_pad - I), (0, 0)))     # (I_pad, 4H)
    whh_t = params["w_hh"].T                                        # (H, 4H)
    w_rec = jnp.concatenate([wih_t, whh_t], axis=0)                 # (I_pad+H, 4H)

    w1_t = params["w_fc1"].T                                        # (T*H, D)
    w2_pad = jnp.pad(params["w_fc2"].T, ((0, 0), (0, C_pad - C)))   # (D, C_pad)

    # Pack all three bias rows into one lane-tile-aligned row.
    b_gate = jnp.pad(params["b_ih"] + params["b_hh"], (0, Pg - fourH))
    b_fc1 = jnp.pad(params["b_fc1"], (0, Pd - D))
    b_fc2 = jnp.pad(params["b_fc2"], (0, C_pad - C))
    bias_all = jnp.concatenate([b_gate, b_fc1, b_fc2])[None, :]     # (1, Pg+Pd+C_pad)

    kernel = functools.partial(fused_lstm_mlp_kernel,
                               B=B, T=T, H=H, D=D, Pg=Pg, Pd=Pd)

    out_pad = pl.pallas_call(
        kernel,
        out_shape=jax.ShapeDtypeStruct((B, C_pad), jnp.float32),
        grid_spec=pltpu.PrefetchScalarGridSpec(
            num_scalar_prefetch=0,
            grid=(1,),
            in_specs=[
                pl.BlockSpec((T * B, I_pad), lambda i: (0, 0)),
                pl.BlockSpec((I_pad + H, fourH), lambda i: (0, 0)),
                pl.BlockSpec((T * H, D), lambda i: (0, 0)),
                pl.BlockSpec((D, C_pad), lambda i: (0, 0)),
                pl.BlockSpec((1, Pg + Pd + C_pad), lambda i: (0, 0)),
            ],
            out_specs=pl.BlockSpec((B, C_pad), lambda i: (0, 0)),
        ),
        compiler_params=pltpu.CompilerParams(
            dimension_semantics=("arbitrary",)),
    )(x_tm, w_rec, w1_t, w2_pad, bias_all)
    return out_pad[:, :C]


# ------------------------------ reference ------------------------------------

def lstm_model2_reference(x, params):
    B, T, I = x.shape
    H = params["w_hh"].shape[1]

    def step(carry, x_t):
        h, c = carry
        gates = (x_t @ params["w_ih"].T + h @ params["w_hh"].T
                 + params["b_ih"] + params["b_hh"])
        i = jax.nn.sigmoid(gates[:, 0:H])
        f = jax.nn.sigmoid(gates[:, H:2 * H])
        g = jnp.tanh(gates[:, 2 * H:3 * H])
        o = jax.nn.sigmoid(gates[:, 3 * H:4 * H])
        c = f * c + i * g
        h = o * jnp.tanh(c)
        return (h, c), h

    h0 = jnp.zeros((B, H), jnp.float32)
    c0 = jnp.zeros((B, H), jnp.float32)
    _, hs = jax.lax.scan(step, (h0, c0), jnp.transpose(x, (1, 0, 2)))
    flat = jnp.transpose(hs, (1, 0, 2)).reshape(B, -1)
    h1 = jnp.maximum(flat @ params["w_fc1"].T + params["b_fc1"], 0.0)
    return h1 @ params["w_fc2"].T + params["b_fc2"]


# --------------------------------- main ---------------------------------------

if __name__ == "__main__":
    # Small, forward-consistent sizes.
    batch = 2
    input_size = 4
    lstm_units = 32
    dense_units = 32
    num_classes = 8
    sequence_length = 8

    key = jax.random.PRNGKey(0)
    ks = jax.random.split(key, 8)

    def uinit(k, shape, fan):
        bound = 1.0 / jnp.sqrt(float(fan))
        return jax.random.uniform(k, shape, jnp.float32, -bound, bound)

    H, I = lstm_units, input_size
    params = {
        "w_ih": uinit(ks[0], (4 * H, I), H),
        "w_hh": uinit(ks[1], (4 * H, H), H),
        "b_ih": uinit(ks[2], (4 * H,), H),
        "b_hh": uinit(ks[3], (4 * H,), H),
        "w_fc1": uinit(ks[4], (dense_units, sequence_length * H),
                       sequence_length * H),
        "b_fc1": uinit(ks[5], (dense_units,), sequence_length * H),
        "w_fc2": uinit(ks[6], (num_classes, dense_units), dense_units),
        "b_fc2": uinit(ks[7], (num_classes,), dense_units),
    }

    x = jax.random.normal(jax.random.PRNGKey(1),
                          (batch, sequence_length, input_size), jnp.float32)

    out = lstm_model2_forward(x, params)
    out = jax.block_until_ready(out)

    ref = lstm_model2_reference(x, params)
    assert out.shape == (batch, num_classes)
    assert jnp.allclose(out, ref, atol=1e-4, rtol=1e-4), "mismatch vs reference"

    print("KERNEL_OK")
</pallas_src>

<mosaic_0001>
module attributes {stable_mosaic.version = 11 : i64} {
  func.func @fused_lstm_mlp_kernel(%arg0: i32, %arg1: memref<16x8xf32, #tpu.memory_space<vmem>>, %arg2: memref<40x128xf32, #tpu.memory_space<vmem>>, %arg3: memref<256x32xf32, #tpu.memory_space<vmem>>, %arg4: memref<32x128xf32, #tpu.memory_space<vmem>>, %arg5: memref<1x384xf32, #tpu.memory_space<vmem>>, %arg6: memref<2x128xf32, #tpu.memory_space<vmem>>) attributes {dimension_semantics = [#tpu.dimension_semantics<arbitrary>], iteration_bounds = array<i64: 1>, scalar_prefetch = 0 : i64, scratch_operands = 0 : i64, tpu.core_type = #tpu.core_type<tc>, window_params = [{pipeline_mode = #tpu.pipeline_mode<synchronous>, transform_indices = @transform_0, window_bounds = array<i64: 16, 8>}, {pipeline_mode = #tpu.pipeline_mode<synchronous>, transform_indices = @transform_1, window_bounds = array<i64: 40, 128>}, {pipeline_mode = #tpu.pipeline_mode<synchronous>, transform_indices = @transform_2, window_bounds = array<i64: 256, 32>}, {pipeline_mode = #tpu.pipeline_mode<synchronous>, transform_indices = @transform_3, window_bounds = array<i64: 32, 128>}, {pipeline_mode = #tpu.pipeline_mode<synchronous>, transform_indices = @transform_4, window_bounds = array<i64: 1, 384>}, {pipeline_mode = #tpu.pipeline_mode<synchronous>, transform_indices = @transform_5, window_bounds = array<i64: 2, 128>}]} {
    %c0 = arith.constant 0 : index
    %c0_0 = arith.constant 0 : index
    %0 = vector.load %arg2[%c0, %c0_0] : memref<40x128xf32, #tpu.memory_space<vmem>>, vector<8x128xf32>
    %c8 = arith.constant 8 : index
    %c0_1 = arith.constant 0 : index
    %1 = vector.load %arg2[%c8, %c0_1] : memref<40x128xf32, #tpu.memory_space<vmem>>, vector<32x128xf32>
    %c0_2 = arith.constant 0 : index
    %c0_3 = arith.constant 0 : index
    %2 = vector.load %arg5[%c0_2, %c0_3] : memref<1x384xf32, #tpu.memory_space<vmem>>, vector<1x128xf32>
    %c0_4 = arith.constant 0 : index
    %c128 = arith.constant 128 : index
    %3 = vector.load %arg5[%c0_4, %c128] : memref<1x384xf32, #tpu.memory_space<vmem>>, vector<1x32xf32>
    %c0_5 = arith.constant 0 : index
    %c256 = arith.constant 256 : index
    %4 = vector.load %arg5[%c0_5, %c256] : memref<1x384xf32, #tpu.memory_space<vmem>>, vector<1x128xf32>
    %c0_6 = arith.constant 0 : index
    %c0_7 = arith.constant 0 : index
    %5 = vector.load %arg1[%c0_6, %c0_7] : memref<16x8xf32, #tpu.memory_space<vmem>>, vector<16x8xf32>
    %cst = arith.constant dense<0.000000e+00> : vector<16x128xf32>
    %6 = tpu.matmul %5, %0, %cst {dimension_numbers = #tpu.dot_dimension_numbers<[1], [0], [0], [1], [0, 0, 1, 1], [], []>} : vector<16x8xf32>, vector<8x128xf32>, vector<16x128xf32> -> vector<16x128xf32>
    %7 = vector.broadcast %2 : vector<1x128xf32> to vector<16x128xf32>
    %8 = arith.addf %6, %7 : vector<16x128xf32>
    %c0_8 = arith.constant 0 : index
    %c0_9 = arith.constant 0 : index
    %9 = vector.load %arg3[%c0_8, %c0_9] : memref<256x32xf32, #tpu.memory_space<vmem>>, vector<256x32xf32>
    %cst_10 = arith.constant 0.000000e+00 : f32
    %10 = vector.broadcast %cst_10 : f32 to vector<2x32xf32>
    %11 = vector.extract_strided_slice %8 {offsets = [0, 0], sizes = [2, 128], strides = [1, 1]} : vector<16x128xf32> to vector<2x128xf32>
    %12 = arith.negf %11 : vector<2x128xf32>
    %13 = math.exp %12 : vector<2x128xf32>
    %cst_11 = arith.constant 1.000000e+00 : f32
    %14 = vector.broadcast %cst_11 : f32 to vector<2x128xf32>
    %15 = arith.addf %14, %13 : vector<2x128xf32>
    %16 = arith.divf %14, %15 : vector<2x128xf32>
    %17 = math.tanh %11 : vector<2x128xf32>
    %18 = vector.extract_strided_slice %16 {offsets = [0, 0], sizes = [2, 32], strides = [1, 1]} : vector<2x128xf32> to vector<2x32xf32>
    %19 = vector.extract_strided_slice %17 {offsets = [0, 64], sizes = [2, 32], strides = [1, 1]} : vector<2x128xf32> to vector<2x32xf32>
    %20 = vector.extract_strided_slice %16 {offsets = [0, 96], sizes = [2, 32], strides = [1, 1]} : vector<2x128xf32> to vector<2x32xf32>
    %21 = arith.mulf %18, %19 : vector<2x32xf32>
    %22 = math.tanh %21 : vector<2x32xf32>
    %23 = arith.mulf %20, %22 : vector<2x32xf32>
    %24 = vector.extract_strided_slice %9 {offsets = [0, 0], sizes = [32, 32], strides = [1, 1]} : vector<256x32xf32> to vector<32x32xf32>
    %cst_12 = arith.constant dense<0.000000e+00> : vector<2x32xf32>
    %25 = tpu.matmul %23, %24, %cst_12 {dimension_numbers = #tpu.dot_dimension_numbers<[1], [0], [0], [1], [0, 0, 1, 1], [], []>} : vector<2x32xf32>, vector<32x32xf32>, vector<2x32xf32> -> vector<2x32xf32>
    %26 = arith.addf %10, %25 : vector<2x32xf32>
    %27 = vector.extract_strided_slice %8 {offsets = [2, 0], sizes = [2, 128], strides = [1, 1]} : vector<16x128xf32> to vector<2x128xf32>
    %cst_13 = arith.constant dense<0.000000e+00> : vector<2x128xf32>
    %28 = tpu.matmul %23, %1, %cst_13 {dimension_numbers = #tpu.dot_dimension_numbers<[1], [0], [0], [1], [0, 0, 1, 1], [], []>} : vector<2x32xf32>, vector<32x128xf32>, vector<2x128xf32> -> vector<2x128xf32>
    %29 = arith.addf %27, %28 : vector<2x128xf32>
    %30 = arith.negf %29 : vector<2x128xf32>
    %31 = math.exp %30 : vector<2x128xf32>
    %cst_14 = arith.constant 1.000000e+00 : f32
    %32 = vector.broadcast %cst_14 : f32 to vector<2x128xf32>
    %33 = arith.addf %32, %31 : vector<2x128xf32>
    %34 = arith.divf %32, %33 : vector<2x128xf32>
    %35 = math.tanh %29 : vector<2x128xf32>
    %36 = vector.extract_strided_slice %34 {offsets = [0, 0], sizes = [2, 32], strides = [1, 1]} : vector<2x128xf32> to vector<2x32xf32>
    %37 = vector.extract_strided_slice %34 {offsets = [0, 32], sizes = [2, 32], strides = [1, 1]} : vector<2x128xf32> to vector<2x32xf32>
    %38 = vector.extract_strided_slice %35 {offsets = [0, 64], sizes = [2, 32], strides = [1, 1]} : vector<2x128xf32> to vector<2x32xf32>
    %39 = vector.extract_strided_slice %34 {offsets = [0, 96], sizes = [2, 32], strides = [1, 1]} : vector<2x128xf32> to vector<2x32xf32>
    %40 = arith.mulf %37, %21 : vector<2x32xf32>
    %41 = arith.mulf %36, %38 : vector<2x32xf32>
    %42 = arith.addf %40, %41 : vector<2x32xf32>
    %43 = math.tanh %42 : vector<2x32xf32>
    %44 = arith.mulf %39, %43 : vector<2x32xf32>
    %45 = vector.extract_strided_slice %9 {offsets = [32, 0], sizes = [32, 32], strides = [1, 1]} : vector<256x32xf32> to vector<32x32xf32>
    %cst_15 = arith.constant dense<0.000000e+00> : vector<2x32xf32>
    %46 = tpu.matmul %44, %45, %cst_15 {dimension_numbers = #tpu.dot_dimension_numbers<[1], [0], [0], [1], [0, 0, 1, 1], [], []>} : vector<2x32xf32>, vector<32x32xf32>, vector<2x32xf32> -> vector<2x32xf32>
    %47 = arith.addf %26, %46 : vector<2x32xf32>
    %48 = vector.extract_strided_slice %8 {offsets = [4, 0], sizes = [2, 128], strides = [1, 1]} : vector<16x128xf32> to vector<2x128xf32>
    %cst_16 = arith.constant dense<0.000000e+00> : vector<2x128xf32>
    %49 = tpu.matmul %44, %1, %cst_16 {dimension_numbers = #tpu.dot_dimension_numbers<[1], [0], [0], [1], [0, 0, 1, 1], [], []>} : vector<2x32xf32>, vector<32x128xf32>, vector<2x128xf32> -> vector<2x128xf32>
    %50 = arith.addf %48, %49 : vector<2x128xf32>
    %51 = arith.negf %50 : vector<2x128xf32>
    %52 = math.exp %51 : vector<2x128xf32>
    %cst_17 = arith.constant 1.000000e+00 : f32
    %53 = vector.broadcast %cst_17 : f32 to vector<2x128xf32>
    %54 = arith.addf %53, %52 : vector<2x128xf32>
    %55 = arith.divf %53, %54 : vector<2x128xf32>
    %56 = math.tanh %50 : vector<2x128xf32>
    %57 = vector.extract_strided_slice %55 {offsets = [0, 0], sizes = [2, 32], strides = [1, 1]} : vector<2x128xf32> to vector<2x32xf32>
    %58 = vector.extract_strided_slice %55 {offsets = [0, 32], sizes = [2, 32], strides = [1, 1]} : vector<2x128xf32> to vector<2x32xf32>
    %59 = vector.extract_strided_slice %56 {offsets = [0, 64], sizes = [2, 32], strides = [1, 1]} : vector<2x128xf32> to vector<2x32xf32>
    %60 = vector.extract_strided_slice %55 {offsets = [0, 96], sizes = [2, 32], strides = [1, 1]} : vector<2x128xf32> to vector<2x32xf32>
    %61 = arith.mulf %58, %42 : vector<2x32xf32>
    %62 = arith.mulf %57, %59 : vector<2x32xf32>
    %63 = arith.addf %61, %62 : vector<2x32xf32>
    %64 = math.tanh %63 : vector<2x32xf32>
    %65 = arith.mulf %60, %64 : vector<2x32xf32>
    %66 = vector.extract_strided_slice %9 {offsets = [64, 0], sizes = [32, 32], strides = [1, 1]} : vector<256x32xf32> to vector<32x32xf32>
    %cst_18 = arith.constant dense<0.000000e+00> : vector<2x32xf32>
    %67 = tpu.matmul %65, %66, %cst_18 {dimension_numbers = #tpu.dot_dimension_numbers<[1], [0], [0], [1], [0, 0, 1, 1], [], []>} : vector<2x32xf32>, vector<32x32xf32>, vector<2x32xf32> -> vector<2x32xf32>
    %68 = arith.addf %47, %67 : vector<2x32xf32>
    %69 = vector.extract_strided_slice %8 {offsets = [6, 0], sizes = [2, 128], strides = [1, 1]} : vector<16x128xf32> to vector<2x128xf32>
    %cst_19 = arith.constant dense<0.000000e+00> : vector<2x128xf32>
    %70 = tpu.matmul %65, %1, %cst_19 {dimension_numbers = #tpu.dot_dimension_numbers<[1], [0], [0], [1], [0, 0, 1, 1], [], []>} : vector<2x32xf32>, vector<32x128xf32>, vector<2x128xf32> -> vector<2x128xf32>
    %71 = arith.addf %69, %70 : vector<2x128xf32>
    %72 = arith.negf %71 : vector<2x128xf32>
    %73 = math.exp %72 : vector<2x128xf32>
    %cst_20 = arith.constant 1.000000e+00 : f32
    %74 = vector.broadcast %cst_20 : f32 to vector<2x128xf32>
    %75 = arith.addf %74, %73 : vector<2x128xf32>
    %76 = arith.divf %74, %75 : vector<2x128xf32>
    %77 = math.tanh %71 : vector<2x128xf32>
    %78 = vector.extract_strided_slice %76 {offsets = [0, 0], sizes = [2, 32], strides = [1, 1]} : vector<2x128xf32> to vector<2x32xf32>
    %79 = vector.extract_strided_slice %76 {offsets = [0, 32], sizes = [2, 32], strides = [1, 1]} : vector<2x128xf32> to vector<2x32xf32>
    %80 = vector.extract_strided_slice %77 {offsets = [0, 64], sizes = [2, 32], strides = [1, 1]} : vector<2x128xf32> to vector<2x32xf32>
    %81 = vector.extract_strided_slice %76 {offsets = [0, 96], sizes = [2, 32], strides = [1, 1]} : vector<2x128xf32> to vector<2x32xf32>
    %82 = arith.mulf %79, %63 : vector<2x32xf32>
    %83 = arith.mulf %78, %80 : vector<2x32xf32>
    %84 = arith.addf %82, %83 : vector<2x32xf32>
    %85 = math.tanh %84 : vector<2x32xf32>
    %86 = arith.mulf %81, %85 : vector<2x32xf32>
    %87 = vector.extract_strided_slice %9 {offsets = [96, 0], sizes = [32, 32], strides = [1, 1]} : vector<256x32xf32> to vector<32x32xf32>
    %cst_21 = arith.constant dense<0.000000e+00> : vector<2x32xf32>
    %88 = tpu.matmul %86, %87, %cst_21 {dimension_numbers = #tpu.dot_dimension_numbers<[1], [0], [0], [1], [0, 0, 1, 1], [], []>} : vector<2x32xf32>, vector<32x32xf32>, vector<2x32xf32> -> vector<2x32xf32>
    %89 = arith.addf %68, %88 : vector<2x32xf32>
    %90 = vector.extract_strided_slice %8 {offsets = [8, 0], sizes = [2, 128], strides = [1, 1]} : vector<16x128xf32> to vector<2x128xf32>
    %cst_22 = arith.constant dense<0.000000e+00> : vector<2x128xf32>
    %91 = tpu.matmul %86, %1, %cst_22 {dimension_numbers = #tpu.dot_dimension_numbers<[1], [0], [0], [1], [0, 0, 1, 1], [], []>} : vector<2x32xf32>, vector<32x128xf32>, vector<2x128xf32> -> vector<2x128xf32>
    %92 = arith.addf %90, %91 : vector<2x128xf32>
    %93 = arith.negf %92 : vector<2x128xf32>
    %94 = math.exp %93 : vector<2x128xf32>
    %cst_23 = arith.constant 1.000000e+00 : f32
    %95 = vector.broadcast %cst_23 : f32 to vector<2x128xf32>
    %96 = arith.addf %95, %94 : vector<2x128xf32>
    %97 = arith.divf %95, %96 : vector<2x128xf32>
    %98 = math.tanh %92 : vector<2x128xf32>
    %99 = vector.extract_strided_slice %97 {offsets = [0, 0], sizes = [2, 32], strides = [1, 1]} : vector<2x128xf32> to vector<2x32xf32>
    %100 = vector.extract_strided_slice %97 {offsets = [0, 32], sizes = [2, 32], strides = [1, 1]} : vector<2x128xf32> to vector<2x32xf32>
    %101 = vector.extract_strided_slice %98 {offsets = [0, 64], sizes = [2, 32], strides = [1, 1]} : vector<2x128xf32> to vector<2x32xf32>
    %102 = vector.extract_strided_slice %97 {offsets = [0, 96], sizes = [2, 32], strides = [1, 1]} : vector<2x128xf32> to vector<2x32xf32>
    %103 = arith.mulf %100, %84 : vector<2x32xf32>
    %104 = arith.mulf %99, %101 : vector<2x32xf32>
    %105 = arith.addf %103, %104 : vector<2x32xf32>
    %106 = math.tanh %105 : vector<2x32xf32>
    %107 = arith.mulf %102, %106 : vector<2x32xf32>
    %108 = vector.extract_strided_slice %9 {offsets = [128, 0], sizes = [32, 32], strides = [1, 1]} : vector<256x32xf32> to vector<32x32xf32>
    %cst_24 = arith.constant dense<0.000000e+00> : vector<2x32xf32>
    %109 = tpu.matmul %107, %108, %cst_24 {dimension_numbers = #tpu.dot_dimension_numbers<[1], [0], [0], [1], [0, 0, 1, 1], [], []>} : vector<2x32xf32>, vector<32x32xf32>, vector<2x32xf32> -> vector<2x32xf32>
    %110 = arith.addf %89, %109 : vector<2x32xf32>
    %111 = vector.extract_strided_slice %8 {offsets = [10, 0], sizes = [2, 128], strides = [1, 1]} : vector<16x128xf32> to vector<2x128xf32>
    %cst_25 = arith.constant dense<0.000000e+00> : vector<2x128xf32>
    %112 = tpu.matmul %107, %1, %cst_25 {dimension_numbers = #tpu.dot_dimension_numbers<[1], [0], [0], [1], [0, 0, 1, 1], [], []>} : vector<2x32xf32>, vector<32x128xf32>, vector<2x128xf32> -> vector<2x128xf32>
    %113 = arith.addf %111, %112 : vector<2x128xf32>
    %114 = arith.negf %113 : vector<2x128xf32>
    %115 = math.exp %114 : vector<2x128xf32>
    %cst_26 = arith.constant 1.000000e+00 : f32
    %116 = vector.broadcast %cst_26 : f32 to vector<2x128xf32>
    %117 = arith.addf %116, %115 : vector<2x128xf32>
    %118 = arith.divf %116, %117 : vector<2x128xf32>
    %119 = math.tanh %113 : vector<2x128xf32>
    %120 = vector.extract_strided_slice %118 {offsets = [0, 0], sizes = [2, 32], strides = [1, 1]} : vector<2x128xf32> to vector<2x32xf32>
    %121 = vector.extract_strided_slice %118 {offsets = [0, 32], sizes = [2, 32], strides = [1, 1]} : vector<2x128xf32> to vector<2x32xf32>
    %122 = vector.extract_strided_slice %119 {offsets = [0, 64], sizes = [2, 32], strides = [1, 1]} : vector<2x128xf32> to vector<2x32xf32>
    %123 = vector.extract_strided_slice %118 {offsets = [0, 96], sizes = [2, 32], strides = [1, 1]} : vector<2x128xf32> to vector<2x32xf32>
    %124 = arith.mulf %121, %105 : vector<2x32xf32>
    %125 = arith.mulf %120, %122 : vector<2x32xf32>
    %126 = arith.addf %124, %125 : vector<2x32xf32>
    %127 = math.tanh %126 : vector<2x32xf32>
    %128 = arith.mulf %123, %127 : vector<2x32xf32>
    %129 = vector.extract_strided_slice %9 {offsets = [160, 0], sizes = [32, 32], strides = [1, 1]} : vector<256x32xf32> to vector<32x32xf32>
    %cst_27 = arith.constant dense<0.000000e+00> : vector<2x32xf32>
    %130 = tpu.matmul %128, %129, %cst_27 {dimension_numbers = #tpu.dot_dimension_numbers<[1], [0], [0], [1], [0, 0, 1, 1], [], []>} : vector<2x32xf32>, vector<32x32xf32>, vector<2x32xf32> -> vector<2x32xf32>
    %131 = arith.addf %110, %130 : vector<2x32xf32>
    %132 = vector.extract_strided_slice %8 {offsets = [12, 0], sizes = [2, 128], strides = [1, 1]} : vector<16x128xf32> to vector<2x128xf32>
    %cst_28 = arith.constant dense<0.000000e+00> : vector<2x128xf32>
    %133 = tpu.matmul %128, %1, %cst_28 {dimension_numbers = #tpu.dot_dimension_numbers<[1], [0], [0], [1], [0, 0, 1, 1], [], []>} : vector<2x32xf32>, vector<32x128xf32>, vector<2x128xf32> -> vector<2x128xf32>
    %134 = arith.addf %132, %133 : vector<2x128xf32>
    %135 = arith.negf %134 : vector<2x128xf32>
    %136 = math.exp %135 : vector<2x128xf32>
    %cst_29 = arith.constant 1.000000e+00 : f32
    %137 = vector.broadcast %cst_29 : f32 to vector<2x128xf32>
    %138 = arith.addf %137, %136 : vector<2x128xf32>
    %139 = arith.divf %137, %138 : vector<2x128xf32>
    %140 = math.tanh %134 : vector<2x128xf32>
    %141 = vector.extract_strided_slice %139 {offsets = [0, 0], sizes = [2, 32], strides = [1, 1]} : vector<2x128xf32> to vector<2x32xf32>
    %142 = vector.extract_strided_slice %139 {offsets = [0, 32], sizes = [2, 32], strides = [1, 1]} : vector<2x128xf32> to vector<2x32xf32>
    %143 = vector.extract_strided_slice %140 {offsets = [0, 64], sizes = [2, 32], strides = [1, 1]} : vector<2x128xf32> to vector<2x32xf32>
    %144 = vector.extract_strided_slice %139 {offsets = [0, 96], sizes = [2, 32], strides = [1, 1]} : vector<2x128xf32> to vector<2x32xf32>
    %145 = arith.mulf %142, %126 : vector<2x32xf32>
    %146 = arith.mulf %141, %143 : vector<2x32xf32>
    %147 = arith.addf %145, %146 : vector<2x32xf32>
    %148 = math.tanh %147 : vector<2x32xf32>
    %149 = arith.mulf %144, %148 : vector<2x32xf32>
    %150 = vector.extract_strided_slice %9 {offsets = [192, 0], sizes = [32, 32], strides = [1, 1]} : vector<256x32xf32> to vector<32x32xf32>
    %cst_30 = arith.constant dense<0.000000e+00> : vector<2x32xf32>
    %151 = tpu.matmul %149, %150, %cst_30 {dimension_numbers = #tpu.dot_dimension_numbers<[1], [0], [0], [1], [0, 0, 1, 1], [], []>} : vector<2x32xf32>, vector<32x32xf32>, vector<2x32xf32> -> vector<2x32xf32>
    %152 = arith.addf %131, %151 : vector<2x32xf32>
    %153 = vector.extract_strided_slice %8 {offsets = [14, 0], sizes = [2, 128], strides = [1, 1]} : vector<16x128xf32> to vector<2x128xf32>
    %cst_31 = arith.constant dense<0.000000e+00> : vector<2x128xf32>
    %154 = tpu.matmul %149, %1, %cst_31 {dimension_numbers = #tpu.dot_dimension_numbers<[1], [0], [0], [1], [0, 0, 1, 1], [], []>} : vector<2x32xf32>, vector<32x128xf32>, vector<2x128xf32> -> vector<2x128xf32>
    %155 = arith.addf %153, %154 : vector<2x128xf32>
    %156 = arith.negf %155 : vector<2x128xf32>
    %157 = math.exp %156 : vector<2x128xf32>
    %cst_32 = arith.constant 1.000000e+00 : f32
    %158 = vector.broadcast %cst_32 : f32 to vector<2x128xf32>
    %159 = arith.addf %158, %157 : vector<2x128xf32>
    %160 = arith.divf %158, %159 : vector<2x128xf32>
    %161 = math.tanh %155 : vector<2x128xf32>
    %162 = vector.extract_strided_slice %160 {offsets = [0, 0], sizes = [2, 32], strides = [1, 1]} : vector<2x128xf32> to vector<2x32xf32>
    %163 = vector.extract_strided_slice %160 {offsets = [0, 32], sizes = [2, 32], strides = [1, 1]} : vector<2x128xf32> to vector<2x32xf32>
    %164 = vector.extract_strided_slice %161 {offsets = [0, 64], sizes = [2, 32], strides = [1, 1]} : vector<2x128xf32> to vector<2x32xf32>
    %165 = vector.extract_strided_slice %160 {offsets = [0, 96], sizes = [2, 32], strides = [1, 1]} : vector<2x128xf32> to vector<2x32xf32>
    %166 = arith.mulf %163, %147 : vector<2x32xf32>
    %167 = arith.mulf %162, %164 : vector<2x32xf32>
    %168 = arith.addf %166, %167 : vector<2x32xf32>
    %169 = math.tanh %168 : vector<2x32xf32>
    %170 = arith.mulf %165, %169 : vector<2x32xf32>
    %171 = vector.extract_strided_slice %9 {offsets = [224, 0], sizes = [32, 32], strides = [1, 1]} : vector<256x32xf32> to vector<32x32xf32>
    %cst_33 = arith.constant dense<0.000000e+00> : vector<2x32xf32>
    %172 = tpu.matmul %170, %171, %cst_33 {dimension_numbers = #tpu.dot_dimension_numbers<[1], [0], [0], [1], [0, 0, 1, 1], [], []>} : vector<2x32xf32>, vector<32x32xf32>, vector<2x32xf32> -> vector<2x32xf32>
    %173 = arith.addf %152, %172 : vector<2x32xf32>
    %174 = vector.broadcast %3 : vector<1x32xf32> to vector<2x32xf32>
    %175 = arith.addf %173, %174 : vector<2x32xf32>
    %cst_34 = arith.constant 0.000000e+00 : f32
    %176 = vector.broadcast %cst_34 : f32 to vector<2x32xf32>
    %177 = arith.maximumf %175, %176 : vector<2x32xf32>
    %c0_35 = arith.constant 0 : index
    %c0_36 = arith.constant 0 : index
    %178 = vector.load %arg4[%c0_35, %c0_36] : memref<32x128xf32, #tpu.memory_space<vmem>>, vector<32x128xf32>
    %cst_37 = arith.constant dense<0.000000e+00> : vector<2x128xf32>
    %179 = tpu.matmul %177, %178, %cst_37 {dimension_numbers = #tpu.dot_dimension_numbers<[1], [0], [0], [1], [0, 0, 1, 1], [], []>} : vector<2x32xf32>, vector<32x128xf32>, vector<2x128xf32> -> vector<2x128xf32>
    %180 = vector.broadcast %4 : vector<1x128xf32> to vector<2x128xf32>
    %181 = arith.addf %179, %180 : vector<2x128xf32>
    %c0_38 = arith.constant 0 : index
    %c0_39 = arith.constant 0 : index
    %182 = vector.load %arg6[%c0_38, %c0_39] : memref<2x128xf32, #tpu.memory_space<vmem>>, vector<2x128xf32>
    tpu.vector_store %arg6[%c0_38, %c0_39], %181 {strides = array<i32>} : memref<2x128xf32, #tpu.memory_space<vmem>>, vector<2x128xf32>,
    return
  }
  func.func @transform_0(%arg0: i32) -> (i32, i32) {
    %c0_i32 = arith.constant 0 : i32
    %c0_i32_0 = arith.constant 0 : i32
    %c0_i32_1 = arith.constant 0 : i32
    return %c0_i32, %c0_i32_0 : i32, i32
  }
  func.func @transform_1(%arg0: i32) -> (i32, i32) {
    %c0_i32 = arith.constant 0 : i32
    %c0_i32_0 = arith.constant 0 : i32
    %c0_i32_1 = arith.constant 0 : i32
    return %c0_i32, %c0_i32_0 : i32, i32
  }
  func.func @transform_2(%arg0: i32) -> (i32, i32) {
    %c0_i32 = arith.constant 0 : i32
    %c0_i32_0 = arith.constant 0 : i32
    %c0_i32_1 = arith.constant 0 : i32
    return %c0_i32, %c0_i32_0 : i32, i32
  }
  func.func @transform_3(%arg0: i32) -> (i32, i32) {
    %c0_i32 = arith.constant 0 : i32
    %c0_i32_0 = arith.constant 0 : i32
    %c0_i32_1 = arith.constant 0 : i32
    return %c0_i32, %c0_i32_0 : i32, i32
  }
  func.func @transform_4(%arg0: i32) -> (i32, i32) {
    %c0_i32 = arith.constant 0 : i32
    %c0_i32_0 = arith.constant 0 : i32
    %c0_i32_1 = arith.constant 0 : i32
    return %c0_i32, %c0_i32_0 : i32, i32
  }
  func.func @transform_5(%arg0: i32) -> (i32, i32) {
    %c0_i32 = arith.constant 0 : i32
    %c0_i32_0 = arith.constant 0 : i32
    %c0_i32_1 = arith.constant 0 : i32
    return %c0_i32, %c0_i32_0 : i32, i32
  }
}

</mosaic_0001>

<llo_original>
// kernel: tpu_custom_call.1
$region0: #{tpu_custom_call.1}
  #allocation0 [shape = 'u32[]', space=smem, size = 0x4, offset = 0x4, fixed_abs, tag = 'smem constant byte address 0x4 - core index']
  #allocation1 [shape = 'u32[144,128]{1,0:T(1,128)}', space=vmem, size = 0x12000, scoped, tag = 'internal scratch']
  %s0 = inlined_call_operand.vmem [shape: f32[16,8], index: 0, kind: input, shape index: {}]
  %s1 = inlined_call_operand.vmem [shape: f32[40,128], index: 1, kind: input, shape index: {}]
  %s2 = inlined_call_operand.vmem [shape: f32[256,32], index: 2, kind: input, shape index: {}]
  %s3 = inlined_call_operand.vmem [shape: f32[32,128], index: 3, kind: input, shape index: {}]
  %s4 = inlined_call_operand.vmem [shape: f32[1,384], index: 4, kind: input, shape index: {}]
  %s5 = inlined_call_operand.hbm [shape: f32[2,128], index: 5, kind: output, shape index: {}]
  %s6 = sld [smem:[#allocation0]]
  $region30: #{tpu_custom_call.1} parent=0
    _
  %s8 = ssub.s32 1, %s6
  %s9 = scalar_select 0, %s8, %s6
  $region1: #{tpu_custom_call.1} parent=0
    #allocation2 [shape = 'u8[1024]{0}', space=vmem, size = 0x400, scoped, tag = 'output window, operand 0, single buffered']
    #allocation3 [shape = 's32[1]{0}', space=sflag, size = 0x4, scoped, tag = 'scoped memory for tpu_custom_call.1']
    %10 = vsyncpa [#allocation3], 0
    // Predicated region
    $region2: #{tpu_custom_call.1} parent=1 // pred_check
      _
    $region3: #{tpu_custom_call.1} parent=1 // pred_check_branch
      %12 = sbr.rel (0) target = $region5
    $region4: #{tpu_custom_call.1} parent=1 // pred_region
      _
    $region5: #{tpu_custom_call.1} parent=1 // pred_fallthru
      _
    // Predicated region
    $region6: #{tpu_custom_call.1} parent=1 // pred_check
      _
    $region7: #{tpu_custom_call.1} parent=1 // pred_check_branch
      %14 = sbr.rel (0) target = $region9
    $region8: #{tpu_custom_call.1} parent=1 // pred_region
      _
    $region9: #{tpu_custom_call.1} parent=1 // pred_fallthru
      _
    // Predicated region
    $region10: #{tpu_custom_call.1} parent=1 // pred_check
      _
    $region11: #{tpu_custom_call.1} parent=1 // pred_check_branch
      %16 = sbr.rel (0) target = $region13
    $region12: #{tpu_custom_call.1} parent=1 // pred_region
      _
    $region13: #{tpu_custom_call.1} parent=1 // pred_fallthru
      _
    // Predicated region
    $region14: #{tpu_custom_call.1} parent=1 // pred_check
      _
    $region15: #{tpu_custom_call.1} parent=1 // pred_check_branch
      %18 = sbr.rel (0) target = $region17
    $region16: #{tpu_custom_call.1} parent=1 // pred_region
      _
    $region17: #{tpu_custom_call.1} parent=1 // pred_fallthru
      _
    // Predicated region
    $region18: #{tpu_custom_call.1} parent=1 // pred_check
      _
    $region19: #{tpu_custom_call.1} parent=1 // pred_check_branch
      %20 = sbr.rel (0) target = $region21
    $region20: #{tpu_custom_call.1} parent=1 // pred_region
      _
    $region21: #{tpu_custom_call.1} parent=1 // pred_fallthru
      _
    %v21 = vld [vmem:[%s1] sm:$0xff]
    %v22 = vld [vmem:[%s1 + $0x8] sm:$0xff]
    %v23 = vld [vmem:[%s1 + $0x10] sm:$0xff]
    %v24 = vld [vmem:[%s1 + $0x18] sm:$0xff]
    %v25 = vld [vmem:[%s1 + $0x20] sm:$0xff]
    %v26 = vld [vmem:[%s4] sm:$0x1]
    %v27 = vld [vmem:[%s4 + $0x1] sm:$0x1]
    %v28 = vld [vmem:[%s4 + $0x2] sm:$0x1]
    %v29 = vld [vmem:[%s0] sm:$0xff]
    %v30 = vld [vmem:[%s0 + $0x8] sm:$0xff]
    %v32 = vlaneseq
    %v33 = vshrl.u32 %v32, 7
    %v34 = vsub.s32 0, %v33
    %v35 = vrot.slane %v26, %v34
    %vm37 = vcmask 64512
    %v39 = vsel %vm37, %v29, 0
    %v42 = vsel %vm37, %v30, 0
    %44 = vmatprep.subr.mxu0 0.0
    %45 = vmatpush1.msra.mxu0 0.0
    %46 = vmatprep.subr.mxu0 0.0
    %47 = vmatpush1.msra.mxu0 0.0
    %48 = vmatprep.subr.mxu0 0.0
    %49 = vmatpush1.msra.mxu0 0.0
    %50 = vmatprep.subr.mxu0 0.0
    %51 = vmatpush1.msra.mxu0 0.0
    %52 = vmatprep.subr.mxu0 0.0
    %53 = vmatpush1.msra.mxu0 0.0
    %54 = vmatprep.subr.mxu0 0.0
    %55 = vmatpush1.msra.mxu0 0.0
    %56 = vmatprep.subr.mxu0 0.0
    %57 = vmatpush1.msra.mxu0 0.0
    %58 = vmatprep.subr.mxu0 0.0
    %59 = vmatpush1.msra.mxu0 0.0
    %60 = vmatprep.subr.mxu0 0.0
    %61 = vmatpush1.msra.mxu0 0.0
    %62 = vmatprep.subr.mxu0 0.0
    %63 = vmatpush1.msra.mxu0 0.0
    %64 = vmatprep.subr.mxu0 0.0
    %65 = vmatpush1.msra.mxu0 0.0
    %66 = vmatprep.subr.mxu0 0.0
    %67 = vmatpush1.msra.mxu0 0.0
    %68 = vmatprep.subr.mxu0 0.0
    %69 = vmatpush1.msra.mxu0 0.0
    %70 = vmatprep.subr.mxu0 0.0
    %71 = vmatpush1.msra.mxu0 0.0
    %72 = vmatprep.subr.mxu0 0.0
    %73 = vmatpush1.msra.mxu0 0.0
    %74 = vmatprep.subr.mxu0 0.0
    %75 = vmatpush1.msra.mxu0 %v21
    %76 = vmatprep.subr.mxu0 0.0
    %77 = vmatpush2.msra.mxu0 0.0
    %78 = vmatprep.subr.mxu0 0.0
    %79 = vmatpush2.msra.mxu0 0.0
    %80 = vmatprep.subr.mxu0 0.0
    %81 = vmatpush2.msra.mxu0 0.0
    %82 = vmatprep.subr.mxu0 0.0
    %83 = vmatpush2.msra.mxu0 0.0
    %84 = vmatprep.subr.mxu0 0.0
    %85 = vmatpush2.msra.mxu0 0.0
    %86 = vmatprep.subr.mxu0 0.0
    %87 = vmatpush2.msra.mxu0 0.0
    %88 = vmatprep.subr.mxu0 0.0
    %89 = vmatpush2.msra.mxu0 0.0
    %90 = vmatprep.subr.mxu0 0.0
    %91 = vmatpush2.msra.mxu0 0.0
    %92 = vmatprep.subr.mxu0 0.0
    %93 = vmatpush2.msra.mxu0 0.0
    %94 = vmatprep.subr.mxu0 0.0
    %95 = vmatpush2.msra.mxu0 0.0
    %96 = vmatprep.subr.mxu0 0.0
    %97 = vmatpush2.msra.mxu0 0.0
    %98 = vmatprep.subr.mxu0 0.0
    %99 = vmatpush2.msra.mxu0 0.0
    %100 = vmatprep.subr.mxu0 0.0
    %101 = vmatpush2.msra.mxu0 0.0
    %102 = vmatprep.subr.mxu0 0.0
    %103 = vmatpush2.msra.mxu0 0.0
    %104 = vmatprep.subr.mxu0 0.0
    %105 = vmatpush2.msra.mxu0 0.0
    %106 = vmatprep.subr.mxu0 0.0
    %107 = vmatpush2.msra.mxu0 0.0
    %108 = vmatprep.mubr.f32.mxu0 0.0
    %109 = vmatmul.mubr.f32.gmra.mxu0 %v39
    %v110 = vpop.f32.mrf.mxu0
    %v111 = vadd.f32 %v35, %v110
    %v112 = vpop.f32.mrf.mxu0
    %113 = vmatprep.mubr.f32.mxu0 0.0
    %114 = vmatmul.mubr.f32.gmra.mxu0 %v42
    %v115 = vpop.f32.mrf.mxu0
    %v116 = vadd.f32 %v35, %v115
    %v117 = vpop.f32.mrf.mxu0
    %118 = vdwg.mxu0
    %v119 = vld [vmem:[%s2] sm:$0xff]
    %v120 = vld [vmem:[%s2 + $0x8] sm:$0xff]
    %v121 = vld [vmem:[%s2 + $0x10] sm:$0xff]
    %v122 = vld [vmem:[%s2 + $0x18] sm:$0xff]
    %v123 = vld [vmem:[%s2 + $0x20] sm:$0xff]
    %v124 = vld [vmem:[%s2 + $0x28] sm:$0xff]
    %v125 = vld [vmem:[%s2 + $0x30] sm:$0xff]
    %v126 = vld [vmem:[%s2 + $0x38] sm:$0xff]
    %v127 = vld [vmem:[%s2 + $0x40] sm:$0xff]
    %v128 = vld [vmem:[%s2 + $0x48] sm:$0xff]
    %v129 = vld [vmem:[%s2 + $0x50] sm:$0xff]
    %v130 = vld [vmem:[%s2 + $0x58] sm:$0xff]
    %v131 = vld [vmem:[%s2 + $0x60] sm:$0xff]
    %v132 = vld [vmem:[%s2 + $0x68] sm:$0xff]
    %v133 = vld [vmem:[%s2 + $0x70] sm:$0xff]
    %v134 = vld [vmem:[%s2 + $0x78] sm:$0xff]
    %v135 = vld [vmem:[%s2 + $0x80] sm:$0xff]
    %v136 = vld [vmem:[%s2 + $0x88] sm:$0xff]
    %v137 = vld [vmem:[%s2 + $0x90] sm:$0xff]
    %v138 = vld [vmem:[%s2 + $0x98] sm:$0xff]
    %v139 = vld [vmem:[%s2 + $0xa0] sm:$0xff]
    %v140 = vld [vmem:[%s2 + $0xa8] sm:$0xff]
    %v141 = vld [vmem:[%s2 + $0xb0] sm:$0xff]
    %v142 = vld [vmem:[%s2 + $0xb8] sm:$0xff]
    %v143 = vld [vmem:[%s2 + $0xc0] sm:$0xff]
    %v144 = vld [vmem:[%s2 + $0xc8] sm:$0xff]
    %v145 = vld [vmem:[%s2 + $0xd0] sm:$0xff]
    %v146 = vld [vmem:[%s2 + $0xd8] sm:$0xff]
    %v147 = vld [vmem:[%s2 + $0xe0] sm:$0xff]
    %v148 = vld [vmem:[%s2 + $0xe8] sm:$0xff]
    %v149 = vld [vmem:[%s2 + $0xf0] sm:$0xff]
    %v150 = vld [vmem:[%s2 + $0xf8] sm:$0xff]
    %v151 = vxor.u32 %v111, 2147483648
    %v152 = vmul.f32 %v151, 1.442695
    %v153 = vpow.pop %v152
    %v154 = vadd.f32 %v153, 1.0
    %v155 = vrcp.pop %v154
    %v156 = vmul.f32 1.0, %v155
    %v157 = vtanh.pop %v111
    %159 = vrot.lane.b32.xlu0 %v157, 64
    %v160 = vpop.permute.xlu0 %159
    %v162 = vmul.f32 %v156, %v160
    %v163 = vtanh.pop %v162
    %165 = vrot.lane.b32.xlu0 %v163, 96
    %v166 = vpop.permute.xlu0 %165
    %v168 = vmul.f32 %v156, %v166
    %170 = vrot.lane.b32.xlu0 %v168, 32
    %v171 = vpop.permute.xlu0 %170
    %vm172 = vcmask 261120
    %v173 = vsel %vm172, %v171, 0
    %175 = vmatprep.subr.mxu0 0.0
    %176 = vmatpush1.msra.mxu0 0.0
    %177 = vmatprep.subr.mxu0 0.0
    %178 = vmatpush1.msra.mxu0 0.0
    %179 = vmatprep.subr.mxu0 0.0
    %180 = vmatpush1.msra.mxu0 0.0
    %181 = vmatprep.subr.mxu0 0.0
    %182 = vmatpush1.msra.mxu0 0.0
    %183 = vmatprep.subr.mxu0 0.0
    %184 = vmatpush1.msra.mxu0 0.0
    %185 = vmatprep.subr.mxu0 0.0
    %186 = vmatpush1.msra.mxu0 0.0
    %187 = vmatprep.subr.mxu0 0.0
    %188 = vmatpush1.msra.mxu0 0.0
    %189 = vmatprep.subr.mxu0 0.0
    %190 = vmatpush1.msra.mxu0 0.0
    %191 = vmatprep.subr.mxu0 0.0
    %192 = vmatpush1.msra.mxu0 0.0
    %193 = vmatprep.subr.mxu0 0.0
    %194 = vmatpush1.msra.mxu0 0.0
    %195 = vmatprep.subr.mxu0 0.0
    %196 = vmatpush1.msra.mxu0 0.0
    %197 = vmatprep.subr.mxu0 0.0
    %198 = vmatpush1.msra.mxu0 0.0
    %199 = vmatprep.subr.mxu0 0.0
    %200 = vmatpush1.msra.mxu0 %v25
    %201 = vmatprep.subr.mxu0 0.0
    %202 = vmatpush1.msra.mxu0 %v24
    %203 = vmatprep.subr.mxu0 0.0
    %204 = vmatpush1.msra.mxu0 %v23
    %205 = vmatprep.subr.mxu0 0.0
    %206 = vmatpush1.msra.mxu0 %v22
    %207 = vmatprep.subr.mxu0 0.0
    %208 = vmatpush2.msra.mxu0 0.0
    %209 = vmatprep.subr.mxu0 0.0
    %210 = vmatpush2.msra.mxu0 0.0
    %211 = vmatprep.subr.mxu0 0.0
    %212 = vmatpush2.msra.mxu0 0.0
    %213 = vmatprep.subr.mxu0 0.0
    %214 = vmatpush2.msra.mxu0 0.0
    %215 = vmatprep.subr.mxu0 0.0
    %216 = vmatpush2.msra.mxu0 0.0
    %217 = vmatprep.subr.mxu0 0.0
    %218 = vmatpush2.msra.mxu0 0.0
    %219 = vmatprep.subr.mxu0 0.0
    %220 = vmatpush2.msra.mxu0 0.0
    %221 = vmatprep.subr.mxu0 0.0
    %222 = vmatpush2.msra.mxu0 0.0
    %223 = vmatprep.subr.mxu0 0.0
    %224 = vmatpush2.msra.mxu0 0.0
    %225 = vmatprep.subr.mxu0 0.0
    %226 = vmatpush2.msra.mxu0 0.0
    %227 = vmatprep.subr.mxu0 0.0
    %228 = vmatpush2.msra.mxu0 0.0
    %229 = vmatprep.subr.mxu0 0.0
    %230 = vmatpush2.msra.mxu0 0.0
    %231 = vmatprep.subr.mxu0 0.0
    %232 = vmatpush2.msra.mxu0 0.0
    %233 = vmatprep.subr.mxu0 0.0
    %234 = vmatpush2.msra.mxu0 0.0
    %235 = vmatprep.subr.mxu0 0.0
    %236 = vmatpush2.msra.mxu0 0.0
    %237 = vmatprep.subr.mxu0 0.0
    %238 = vmatpush2.msra.mxu0 0.0
    %239 = vmatprep.mubr.f32.mxu0 0.0
    %240 = vmatmul.mubr.f32.gmra.mxu0 %v173
    %v241 = vpop.f32.mrf.mxu0
    %v242 = vadd.f32 0.0, %v241
    %v243 = vpop.f32.mrf.mxu0
    %244 = vdwg.mxu0
    %v246 = vrot.slane %v242, 6
    %v248 = vadd.f32 %v111, %v246
    %v249 = vxor.u32 %v248, 2147483648
    %v250 = vmul.f32 %v249, 1.442695
    %v251 = vpow.pop %v250
    %v252 = vadd.f32 %v251, 1.0
    %v253 = vrcp.pop %v252
    %v254 = vmul.f32 1.0, %v253
    %v255 = vtanh.pop %v248
    %v257 = vrot.slane %v162, 6
    %258 = vrot.lane.b32.xlu0 %v257, 32
    %v259 = vpop.permute.xlu0 %258
    %v261 = vmul.f32 %v254, %v259
    %263 = vrot.lane.b32.xlu0 %v255, 64
    %v264 = vpop.permute.xlu0 %263
    %v266 = vmul.f32 %v254, %v264
    %268 = vrot.lane.b32.xlu0 %v266, 32
    %v269 = vpop.permute.xlu0 %268
    %v271 = vadd.f32 %v261, %v269
    %v272 = vtanh.pop %v271
    %274 = vrot.lane.b32.xlu0 %v272, 64
    %v275 = vpop.permute.xlu0 %274
    %v277 = vmul.f32 %v254, %v275
    %v279 = vrot.slane %v277, 2
    %280 = vrot.lane.b32.xlu0 %v279, 32
    %v281 = vpop.permute.xlu0 %280
    %v282 = vsel %vm172, %v281, 0
    %284 = vmatprep.subr.mxu0 0.0
    %285 = vmatpush1.msra.mxu0 0.0
    %286 = vmatprep.subr.mxu0 0.0
    %287 = vmatpush1.msra.mxu0 0.0
    %288 = vmatprep.subr.mxu0 0.0
    %289 = vmatpush1.msra.mxu0 0.0
    %290 = vmatprep.subr.mxu0 0.0
    %291 = vmatpush1.msra.mxu0 0.0
    %292 = vmatprep.subr.mxu0 0.0
    %293 = vmatpush1.msra.mxu0 0.0
    %294 = vmatprep.subr.mxu0 0.0
    %295 = vmatpush1.msra.mxu0 0.0
    %296 = vmatprep.subr.mxu0 0.0
    %297 = vmatpush1.msra.mxu0 0.0
    %298 = vmatprep.subr.mxu0 0.0
    %299 = vmatpush1.msra.mxu0 0.0
    %300 = vmatprep.subr.mxu0 0.0
    %301 = vmatpush1.msra.mxu0 0.0
    %302 = vmatprep.subr.mxu0 0.0
    %303 = vmatpush1.msra.mxu0 0.0
    %304 = vmatprep.subr.mxu0 0.0
    %305 = vmatpush1.msra.mxu0 0.0
    %306 = vmatprep.subr.mxu0 0.0
    %307 = vmatpush1.msra.mxu0 0.0
    %308 = vmatprep.subr.mxu0 0.0
    %309 = vmatpush1.msra.mxu0 %v126
    %310 = vmatprep.subr.mxu0 0.0
    %311 = vmatpush1.msra.mxu0 %v125
    %312 = vmatprep.subr.mxu0 0.0
    %313 = vmatpush1.msra.mxu0 %v124
    %314 = vmatprep.subr.mxu0 0.0
    %315 = vmatpush1.msra.mxu0 %v123
    %316 = vmatprep.subr.mxu0 0.0
    %317 = vmatpush2.msra.mxu0 0.0
    %318 = vmatprep.subr.mxu0 0.0
    %319 = vmatpush2.msra.mxu0 0.0
    %320 = vmatprep.subr.mxu0 0.0
    %321 = vmatpush2.msra.mxu0 0.0
    %322 = vmatprep.subr.mxu0 0.0
    %323 = vmatpush2.msra.mxu0 0.0
    %324 = vmatprep.subr.mxu0 0.0
    %325 = vmatpush2.msra.mxu0 0.0
    %326 = vmatprep.subr.mxu0 0.0
    %327 = vmatpush2.msra.mxu0 0.0
    %328 = vmatprep.subr.mxu0 0.0
    %329 = vmatpush2.msra.mxu0 0.0
    %330 = vmatprep.subr.mxu0 0.0
    %331 = vmatpush2.msra.mxu0 0.0
    %332 = vmatprep.subr.mxu0 0.0
    %333 = vmatpush2.msra.mxu0 0.0
    %334 = vmatprep.subr.mxu0 0.0
    %335 = vmatpush2.msra.mxu0 0.0
    %336 = vmatprep.subr.mxu0 0.0
    %337 = vmatpush2.msra.mxu0 0.0
    %338 = vmatprep.subr.mxu0 0.0
    %339 = vmatpush2.msra.mxu0 0.0
    %340 = vmatprep.subr.mxu0 0.0
    %341 = vmatpush2.msra.mxu0 0.0
    %342 = vmatprep.subr.mxu0 0.0
    %343 = vmatpush2.msra.mxu0 0.0
    %344 = vmatprep.subr.mxu0 0.0
    %345 = vmatpush2.msra.mxu0 0.0
    %346 = vmatprep.subr.mxu0 0.0
    %347 = vmatpush2.msra.mxu0 0.0
    %348 = vmatprep.mubr.f32.mxu0 0.0
    %349 = vmatmul.mubr.f32.gmra.mxu0 %v282
    %v350 = vpop.f32.mrf.mxu0
    %v351 = vadd.f32 0.0, %v350
    %v352 = vpop.f32.mrf.mxu0
    %353 = vdwg.mxu0
    %354 = vmatprep.subr.mxu0 0.0
    %355 = vmatpush1.msra.mxu0 0.0
    %356 = vmatprep.subr.mxu0 0.0
    %357 = vmatpush1.msra.mxu0 0.0
    %358 = vmatprep.subr.mxu0 0.0
    %359 = vmatpush1.msra.mxu0 0.0
    %360 = vmatprep.subr.mxu0 0.0
    %361 = vmatpush1.msra.mxu0 0.0
    %362 = vmatprep.subr.mxu0 0.0
    %363 = vmatpush1.msra.mxu0 0.0
    %364 = vmatprep.subr.mxu0 0.0
    %365 = vmatpush1.msra.mxu0 0.0
    %366 = vmatprep.subr.mxu0 0.0
    %367 = vmatpush1.msra.mxu0 0.0
    %368 = vmatprep.subr.mxu0 0.0
    %369 = vmatpush1.msra.mxu0 0.0
    %370 = vmatprep.subr.mxu0 0.0
    %371 = vmatpush1.msra.mxu0 0.0
    %372 = vmatprep.subr.mxu0 0.0
    %373 = vmatpush1.msra.mxu0 0.0
    %374 = vmatprep.subr.mxu0 0.0
    %375 = vmatpush1.msra.mxu0 0.0
    %376 = vmatprep.subr.mxu0 0.0
    %377 = vmatpush1.msra.mxu0 0.0
    %378 = vmatprep.subr.mxu0 0.0
    %379 = vmatpush1.msra.mxu0 %v122
    %380 = vmatprep.subr.mxu0 0.0
    %381 = vmatpush1.msra.mxu0 %v121
    %382 = vmatprep.subr.mxu0 0.0
    %383 = vmatpush1.msra.mxu0 %v120
    %384 = vmatprep.subr.mxu0 0.0
    %385 = vmatpush1.msra.mxu0 %v119
    %386 = vmatprep.subr.mxu0 0.0
    %387 = vmatpush2.msra.mxu0 0.0
    %388 = vmatprep.subr.mxu0 0.0
    %389 = vmatpush2.msra.mxu0 0.0
    %390 = vmatprep.subr.mxu0 0.0
    %391 = vmatpush2.msra.mxu0 0.0
    %392 = vmatprep.subr.mxu0 0.0
    %393 = vmatpush2.msra.mxu0 0.0
    %394 = vmatprep.subr.mxu0 0.0
    %395 = vmatpush2.msra.mxu0 0.0
    %396 = vmatprep.subr.mxu0 0.0
    %397 = vmatpush2.msra.mxu0 0.0
    %398 = vmatprep.subr.mxu0 0.0
    %399 = vmatpush2.msra.mxu0 0.0
    %400 = vmatprep.subr.mxu0 0.0
    %401 = vmatpush2.msra.mxu0 0.0
    %402 = vmatprep.subr.mxu0 0.0
    %403 = vmatpush2.msra.mxu0 0.0
    %404 = vmatprep.subr.mxu0 0.0
    %405 = vmatpush2.msra.mxu0 0.0
    %406 = vmatprep.subr.mxu0 0.0
    %407 = vmatpush2.msra.mxu0 0.0
    %408 = vmatprep.subr.mxu0 0.0
    %409 = vmatpush2.msra.mxu0 0.0
    %410 = vmatprep.subr.mxu0 0.0
    %411 = vmatpush2.msra.mxu0 0.0
    %412 = vmatprep.subr.mxu0 0.0
    %413 = vmatpush2.msra.mxu0 0.0
    %414 = vmatprep.subr.mxu0 0.0
    %415 = vmatpush2.msra.mxu0 0.0
    %416 = vmatprep.subr.mxu0 0.0
    %417 = vmatpush2.msra.mxu0 0.0
    %418 = vmatprep.mubr.f32.mxu0 0.0
    %419 = vmatmul.mubr.f32.gmra.mxu0 %v173
    %v420 = vpop.f32.mrf.mxu0
    %v421 = vadd.f32 %v351, %v420
    %v422 = vpop.f32.mrf.mxu0
    %423 = vdwg.mxu0
    %424 = vmatprep.subr.mxu0 0.0
    %425 = vmatpush1.msra.mxu0 0.0
    %426 = vmatprep.subr.mxu0 0.0
    %427 = vmatpush1.msra.mxu0 0.0
    %428 = vmatprep.subr.mxu0 0.0
    %429 = vmatpush1.msra.mxu0 0.0
    %430 = vmatprep.subr.mxu0 0.0
    %431 = vmatpush1.msra.mxu0 0.0
    %432 = vmatprep.subr.mxu0 0.0
    %433 = vmatpush1.msra.mxu0 0.0
    %434 = vmatprep.subr.mxu0 0.0
    %435 = vmatpush1.msra.mxu0 0.0
    %436 = vmatprep.subr.mxu0 0.0
    %437 = vmatpush1.msra.mxu0 0.0
    %438 = vmatprep.subr.mxu0 0.0
    %439 = vmatpush1.msra.mxu0 0.0
    %440 = vmatprep.subr.mxu0 0.0
    %441 = vmatpush1.msra.mxu0 0.0
    %442 = vmatprep.subr.mxu0 0.0
    %443 = vmatpush1.msra.mxu0 0.0
    %444 = vmatprep.subr.mxu0 0.0
    %445 = vmatpush1.msra.mxu0 0.0
    %446 = vmatprep.subr.mxu0 0.0
    %447 = vmatpush1.msra.mxu0 0.0
    %448 = vmatprep.subr.mxu0 0.0
    %449 = vmatpush1.msra.mxu0 %v25
    %450 = vmatprep.subr.mxu0 0.0
    %451 = vmatpush1.msra.mxu0 %v24
    %452 = vmatprep.subr.mxu0 0.0
    %453 = vmatpush1.msra.mxu0 %v23
    %454 = vmatprep.subr.mxu0 0.0
    %455 = vmatpush1.msra.mxu0 %v22
    %456 = vmatprep.subr.mxu0 0.0
    %457 = vmatpush2.msra.mxu0 0.0
    %458 = vmatprep.subr.mxu0 0.0
    %459 = vmatpush2.msra.mxu0 0.0
    %460 = vmatprep.subr.mxu0 0.0
    %461 = vmatpush2.msra.mxu0 0.0
    %462 = vmatprep.subr.mxu0 0.0
    %463 = vmatpush2.msra.mxu0 0.0
    %464 = vmatprep.subr.mxu0 0.0
    %465 = vmatpush2.msra.mxu0 0.0
    %466 = vmatprep.subr.mxu0 0.0
    %467 = vmatpush2.msra.mxu0 0.0
    %468 = vmatprep.subr.mxu0 0.0
    %469 = vmatpush2.msra.mxu0 0.0
    %470 = vmatprep.subr.mxu0 0.0
    %471 = vmatpush2.msra.mxu0 0.0
    %472 = vmatprep.subr.mxu0 0.0
    %473 = vmatpush2.msra.mxu0 0.0
    %474 = vmatprep.subr.mxu0 0.0
    %475 = vmatpush2.msra.mxu0 0.0
    %476 = vmatprep.subr.mxu0 0.0
    %477 = vmatpush2.msra.mxu0 0.0
    %478 = vmatprep.subr.mxu0 0.0
    %479 = vmatpush2.msra.mxu0 0.0
    %480 = vmatprep.subr.mxu0 0.0
    %481 = vmatpush2.msra.mxu0 0.0
    %482 = vmatprep.subr.mxu0 0.0
    %483 = vmatpush2.msra.mxu0 0.0
    %484 = vmatprep.subr.mxu0 0.0
    %485 = vmatpush2.msra.mxu0 0.0
    %486 = vmatprep.subr.mxu0 0.0
    %487 = vmatpush2.msra.mxu0 0.0
    %488 = vmatprep.mubr.f32.mxu0 0.0
    %489 = vmatmul.mubr.f32.gmra.mxu0 %v282
    %v490 = vpop.f32.mrf.mxu0
    %v491 = vadd.f32 0.0, %v490
    %v492 = vpop.f32.mrf.mxu0
    %493 = vdwg.mxu0
    %v495 = vrot.slane %v491, 4
    %v497 = vadd.f32 %v111, %v495
    %v498 = vxor.u32 %v497, 2147483648
    %v499 = vmul.f32 %v498, 1.442695
    %v500 = vpow.pop %v499
    %v501 = vadd.f32 %v500, 1.0
    %v502 = vrcp.pop %v501
    %v503 = vmul.f32 1.0, %v502
    %v504 = vtanh.pop %v497
    %v506 = vrot.slane %v271, 6
    %v508 = vmul.f32 %v503, %v506
    %510 = vrot.lane.b32.xlu0 %v504, 64
    %v511 = vpop.permute.xlu0 %510
    %v513 = vmul.f32 %v503, %v511
    %515 = vrot.lane.b32.xlu0 %v513, 32
    %v516 = vpop.permute.xlu0 %515
    %v518 = vadd.f32 %v508, %v516
    %v519 = vtanh.pop %v518
    %521 = vrot.lane.b32.xlu0 %v519, 64
    %v522 = vpop.permute.xlu0 %521
    %v524 = vmul.f32 %v503, %v522
    %v526 = vrot.slane %v524, 4
    %527 = vrot.lane.b32.xlu0 %v526, 32
    %v528 = vpop.permute.xlu0 %527
    %v529 = vsel %vm172, %v528, 0
    %531 = vmatprep.subr.mxu0 0.0
    %532 = vmatpush1.msra.mxu0 0.0
    %533 = vmatprep.subr.mxu0 0.0
    %534 = vmatpush1.msra.mxu0 0.0
    %535 = vmatprep.subr.mxu0 0.0
    %536 = vmatpush1.msra.mxu0 0.0
    %537 = vmatprep.subr.mxu0 0.0
    %538 = vmatpush1.msra.mxu0 0.0
    %539 = vmatprep.subr.mxu0 0.0
    %540 = vmatpush1.msra.mxu0 0.0
    %541 = vmatprep.subr.mxu0 0.0
    %542 = vmatpush1.msra.mxu0 0.0
    %543 = vmatprep.subr.mxu0 0.0
    %544 = vmatpush1.msra.mxu0 0.0
    %545 = vmatprep.subr.mxu0 0.0
    %546 = vmatpush1.msra.mxu0 0.0
    %547 = vmatprep.subr.mxu0 0.0
    %548 = vmatpush1.msra.mxu0 0.0
    %549 = vmatprep.subr.mxu0 0.0
    %550 = vmatpush1.msra.mxu0 0.0
    %551 = vmatprep.subr.mxu0 0.0
    %552 = vmatpush1.msra.mxu0 0.0
    %553 = vmatprep.subr.mxu0 0.0
    %554 = vmatpush1.msra.mxu0 0.0
    %555 = vmatprep.subr.mxu0 0.0
    %556 = vmatpush1.msra.mxu0 %v130
    %557 = vmatprep.subr.mxu0 0.0
    %558 = vmatpush1.msra.mxu0 %v129
    %559 = vmatprep.subr.mxu0 0.0
    %560 = vmatpush1.msra.mxu0 %v128
    %561 = vmatprep.subr.mxu0 0.0
    %562 = vmatpush1.msra.mxu0 %v127
    %563 = vmatprep.subr.mxu0 0.0
    %564 = vmatpush2.msra.mxu0 0.0
    %565 = vmatprep.subr.mxu0 0.0
    %566 = vmatpush2.msra.mxu0 0.0
    %567 = vmatprep.subr.mxu0 0.0
    %568 = vmatpush2.msra.mxu0 0.0
    %569 = vmatprep.subr.mxu0 0.0
    %570 = vmatpush2.msra.mxu0 0.0
    %571 = vmatprep.subr.mxu0 0.0
    %572 = vmatpush2.msra.mxu0 0.0
    %573 = vmatprep.subr.mxu0 0.0
    %574 = vmatpush2.msra.mxu0 0.0
    %575 = vmatprep.subr.mxu0 0.0
    %576 = vmatpush2.msra.mxu0 0.0
    %577 = vmatprep.subr.mxu0 0.0
    %578 = vmatpush2.msra.mxu0 0.0
    %579 = vmatprep.subr.mxu0 0.0
    %580 = vmatpush2.msra.mxu0 0.0
    %581 = vmatprep.subr.mxu0 0.0
    %582 = vmatpush2.msra.mxu0 0.0
    %583 = vmatprep.subr.mxu0 0.0
    %584 = vmatpush2.msra.mxu0 0.0
    %585 = vmatprep.subr.mxu0 0.0
    %586 = vmatpush2.msra.mxu0 0.0
    %587 = vmatprep.subr.mxu0 0.0
    %588 = vmatpush2.msra.mxu0 0.0
    %589 = vmatprep.subr.mxu0 0.0
    %590 = vmatpush2.msra.mxu0 0.0
    %591 = vmatprep.subr.mxu0 0.0
    %592 = vmatpush2.msra.mxu0 0.0
    %593 = vmatprep.subr.mxu0 0.0
    %594 = vmatpush2.msra.mxu0 0.0
    %595 = vmatprep.mubr.f32.mxu0 0.0
    %596 = vmatmul.mubr.f32.gmra.mxu0 %v529
    %v597 = vpop.f32.mrf.mxu0
    %v598 = vadd.f32 0.0, %v597
    %v599 = vpop.f32.mrf.mxu0
    %600 = vdwg.mxu0
    %v601 = vadd.f32 %v421, %v598
    %602 = vmatprep.subr.mxu0 0.0
    %603 = vmatpush1.msra.mxu0 0.0
    %604 = vmatprep.subr.mxu0 0.0
    %605 = vmatpush1.msra.mxu0 0.0
    %606 = vmatprep.subr.mxu0 0.0
    %607 = vmatpush1.msra.mxu0 0.0
    %608 = vmatprep.subr.mxu0 0.0
    %609 = vmatpush1.msra.mxu0 0.0
    %610 = vmatprep.subr.mxu0 0.0
    %611 = vmatpush1.msra.mxu0 0.0
    %612 = vmatprep.subr.mxu0 0.0
    %613 = vmatpush1.msra.mxu0 0.0
    %614 = vmatprep.subr.mxu0 0.0
    %615 = vmatpush1.msra.mxu0 0.0
    %616 = vmatprep.subr.mxu0 0.0
    %617 = vmatpush1.msra.mxu0 0.0
    %618 = vmatprep.subr.mxu0 0.0
    %619 = vmatpush1.msra.mxu0 0.0
    %620 = vmatprep.subr.mxu0 0.0
    %621 = vmatpush1.msra.mxu0 0.0
    %622 = vmatprep.subr.mxu0 0.0
    %623 = vmatpush1.msra.mxu0 0.0
    %624 = vmatprep.subr.mxu0 0.0
    %625 = vmatpush1.msra.mxu0 0.0
    %626 = vmatprep.subr.mxu0 0.0
    %627 = vmatpush1.msra.mxu0 %v25
    %628 = vmatprep.subr.mxu0 0.0
    %629 = vmatpush1.msra.mxu0 %v24
    %630 = vmatprep.subr.mxu0 0.0
    %631 = vmatpush1.msra.mxu0 %v23
    %632 = vmatprep.subr.mxu0 0.0
    %633 = vmatpush1.msra.mxu0 %v22
    %634 = vmatprep.subr.mxu0 0.0
    %635 = vmatpush2.msra.mxu0 0.0
    %636 = vmatprep.subr.mxu0 0.0
    %637 = vmatpush2.msra.mxu0 0.0
    %638 = vmatprep.subr.mxu0 0.0
    %639 = vmatpush2.msra.mxu0 0.0
    %640 = vmatprep.subr.mxu0 0.0
    %641 = vmatpush2.msra.mxu0 0.0
    %642 = vmatprep.subr.mxu0 0.0
    %643 = vmatpush2.msra.mxu0 0.0
    %644 = vmatprep.subr.mxu0 0.0
    %645 = vmatpush2.msra.mxu0 0.0
    %646 = vmatprep.subr.mxu0 0.0
    %647 = vmatpush2.msra.mxu0 0.0
    %648 = vmatprep.subr.mxu0 0.0
    %649 = vmatpush2.msra.mxu0 0.0
    %650 = vmatprep.subr.mxu0 0.0
    %651 = vmatpush2.msra.mxu0 0.0
    %652 = vmatprep.subr.mxu0 0.0
    %653 = vmatpush2.msra.mxu0 0.0
    %654 = vmatprep.subr.mxu0 0.0
    %655 = vmatpush2.msra.mxu0 0.0
    %656 = vmatprep.subr.mxu0 0.0
    %657 = vmatpush2.msra.mxu0 0.0
    %658 = vmatprep.subr.mxu0 0.0
    %659 = vmatpush2.msra.mxu0 0.0
    %660 = vmatprep.subr.mxu0 0.0
    %661 = vmatpush2.msra.mxu0 0.0
    %662 = vmatprep.subr.mxu0 0.0
    %663 = vmatpush2.msra.mxu0 0.0
    %664 = vmatprep.subr.mxu0 0.0
    %665 = vmatpush2.msra.mxu0 0.0
    %666 = vmatprep.mubr.f32.mxu0 0.0
    %667 = vmatmul.mubr.f32.gmra.mxu0 %v529
    %v668 = vpop.f32.mrf.mxu0
    %v669 = vadd.f32 0.0, %v668
    %v670 = vpop.f32.mrf.mxu0
    %671 = vdwg.mxu0
    %v673 = vrot.slane %v669, 2
    %v675 = vadd.f32 %v111, %v673
    %v676 = vxor.u32 %v675, 2147483648
    %v677 = vmul.f32 %v676, 1.442695
    %v678 = vpow.pop %v677
    %v679 = vadd.f32 %v678, 1.0
    %v680 = vrcp.pop %v679
    %v681 = vmul.f32 1.0, %v680
    %v682 = vtanh.pop %v675
    %v684 = vrot.slane %v518, 6
    %v686 = vmul.f32 %v681, %v684
    %688 = vrot.lane.b32.xlu0 %v682, 64
    %v689 = vpop.permute.xlu0 %688
    %v691 = vmul.f32 %v681, %v689
    %693 = vrot.lane.b32.xlu0 %v691, 32
    %v694 = vpop.permute.xlu0 %693
    %v696 = vadd.f32 %v686, %v694
    %v697 = vtanh.pop %v696
    %699 = vrot.lane.b32.xlu0 %v697, 64
    %v700 = vpop.permute.xlu0 %699
    %v702 = vmul.f32 %v681, %v700
    %v704 = vrot.slane %v702, 6
    %705 = vrot.lane.b32.xlu0 %v704, 32
    %v706 = vpop.permute.xlu0 %705
    %v707 = vsel %vm172, %v706, 0
    %709 = vmatprep.subr.mxu0 0.0
    %710 = vmatpush1.msra.mxu0 0.0
    %711 = vmatprep.subr.mxu0 0.0
    %712 = vmatpush1.msra.mxu0 0.0
    %713 = vmatprep.subr.mxu0 0.0
    %714 = vmatpush1.msra.mxu0 0.0
    %715 = vmatprep.subr.mxu0 0.0
    %716 = vmatpush1.msra.mxu0 0.0
    %717 = vmatprep.subr.mxu0 0.0
    %718 = vmatpush1.msra.mxu0 0.0
    %719 = vmatprep.subr.mxu0 0.0
    %720 = vmatpush1.msra.mxu0 0.0
    %721 = vmatprep.subr.mxu0 0.0
    %722 = vmatpush1.msra.mxu0 0.0
    %723 = vmatprep.subr.mxu0 0.0
    %724 = vmatpush1.msra.mxu0 0.0
    %725 = vmatprep.subr.mxu0 0.0
    %726 = vmatpush1.msra.mxu0 0.0
    %727 = vmatprep.subr.mxu0 0.0
    %728 = vmatpush1.msra.mxu0 0.0
    %729 = vmatprep.subr.mxu0 0.0
    %730 = vmatpush1.msra.mxu0 0.0
    %731 = vmatprep.subr.mxu0 0.0
    %732 = vmatpush1.msra.mxu0 0.0
    %733 = vmatprep.subr.mxu0 0.0
    %734 = vmatpush1.msra.mxu0 %v134
    %735 = vmatprep.subr.mxu0 0.0
    %736 = vmatpush1.msra.mxu0 %v133
    %737 = vmatprep.subr.mxu0 0.0
    %738 = vmatpush1.msra.mxu0 %v132
    %739 = vmatprep.subr.mxu0 0.0
    %740 = vmatpush1.msra.mxu0 %v131
    %741 = vmatprep.subr.mxu0 0.0
    %742 = vmatpush2.msra.mxu0 0.0
    %743 = vmatprep.subr.mxu0 0.0
    %744 = vmatpush2.msra.mxu0 0.0
    %745 = vmatprep.subr.mxu0 0.0
    %746 = vmatpush2.msra.mxu0 0.0
    %747 = vmatprep.subr.mxu0 0.0
    %748 = vmatpush2.msra.mxu0 0.0
    %749 = vmatprep.subr.mxu0 0.0
    %750 = vmatpush2.msra.mxu0 0.0
    %751 = vmatprep.subr.mxu0 0.0
    %752 = vmatpush2.msra.mxu0 0.0
    %753 = vmatprep.subr.mxu0 0.0
    %754 = vmatpush2.msra.mxu0 0.0
    %755 = vmatprep.subr.mxu0 0.0
    %756 = vmatpush2.msra.mxu0 0.0
    %757 = vmatprep.subr.mxu0 0.0
    %758 = vmatpush2.msra.mxu0 0.0
    %759 = vmatprep.subr.mxu0 0.0
    %760 = vmatpush2.msra.mxu0 0.0
    %761 = vmatprep.subr.mxu0 0.0
    %762 = vmatpush2.msra.mxu0 0.0
    %763 = vmatprep.subr.mxu0 0.0
    %764 = vmatpush2.msra.mxu0 0.0
    %765 = vmatprep.subr.mxu0 0.0
    %766 = vmatpush2.msra.mxu0 0.0
    %767 = vmatprep.subr.mxu0 0.0
    %768 = vmatpush2.msra.mxu0 0.0
    %769 = vmatprep.subr.mxu0 0.0
    %770 = vmatpush2.msra.mxu0 0.0
    %771 = vmatprep.subr.mxu0 0.0
    %772 = vmatpush2.msra.mxu0 0.0
    %773 = vmatprep.mubr.f32.mxu0 0.0
    %774 = vmatmul.mubr.f32.gmra.mxu0 %v707
    %v775 = vpop.f32.mrf.mxu0
    %v776 = vadd.f32 0.0, %v775
    %v777 = vpop.f32.mrf.mxu0
    %778 = vdwg.mxu0
    %v779 = vadd.f32 %v601, %v776
    %780 = vmatprep.subr.mxu0 0.0
    %781 = vmatpush1.msra.mxu0 0.0
    %782 = vmatprep.subr.mxu0 0.0
    %783 = vmatpush1.msra.mxu0 0.0
    %784 = vmatprep.subr.mxu0 0.0
    %785 = vmatpush1.msra.mxu0 0.0
    %786 = vmatprep.subr.mxu0 0.0
    %787 = vmatpush1.msra.mxu0 0.0
    %788 = vmatprep.subr.mxu0 0.0
    %789 = vmatpush1.msra.mxu0 0.0
    %790 = vmatprep.subr.mxu0 0.0
    %791 = vmatpush1.msra.mxu0 0.0
    %792 = vmatprep.subr.mxu0 0.0
    %793 = vmatpush1.msra.mxu0 0.0
    %794 = vmatprep.subr.mxu0 0.0
    %795 = vmatpush1.msra.mxu0 0.0
    %796 = vmatprep.subr.mxu0 0.0
    %797 = vmatpush1.msra.mxu0 0.0
    %798 = vmatprep.subr.mxu0 0.0
    %799 = vmatpush1.msra.mxu0 0.0
    %800 = vmatprep.subr.mxu0 0.0
    %801 = vmatpush1.msra.mxu0 0.0
    %802 = vmatprep.subr.mxu0 0.0
    %803 = vmatpush1.msra.mxu0 0.0
    %804 = vmatprep.subr.mxu0 0.0
    %805 = vmatpush1.msra.mxu0 %v25
    %806 = vmatprep.subr.mxu0 0.0
    %807 = vmatpush1.msra.mxu0 %v24
    %808 = vmatprep.subr.mxu0 0.0
    %809 = vmatpush1.msra.mxu0 %v23
    %810 = vmatprep.subr.mxu0 0.0
    %811 = vmatpush1.msra.mxu0 %v22
    %812 = vmatprep.subr.mxu0 0.0
    %813 = vmatpush2.msra.mxu0 0.0
    %814 = vmatprep.subr.mxu0 0.0
    %815 = vmatpush2.msra.mxu0 0.0
    %816 = vmatprep.subr.mxu0 0.0
    %817 = vmatpush2.msra.mxu0 0.0
    %818 = vmatprep.subr.mxu0 0.0
    %819 = vmatpush2.msra.mxu0 0.0
    %820 = vmatprep.subr.mxu0 0.0
    %821 = vmatpush2.msra.mxu0 0.0
    %822 = vmatprep.subr.mxu0 0.0
    %823 = vmatpush2.msra.mxu0 0.0
    %824 = vmatprep.subr.mxu0 0.0
    %825 = vmatpush2.msra.mxu0 0.0
    %826 = vmatprep.subr.mxu0 0.0
    %827 = vmatpush2.msra.mxu0 0.0
    %828 = vmatprep.subr.mxu0 0.0
    %829 = vmatpush2.msra.mxu0 0.0
    %830 = vmatprep.subr.mxu0 0.0
    %831 = vmatpush2.msra.mxu0 0.0
    %832 = vmatprep.subr.mxu0 0.0
    %833 = vmatpush2.msra.mxu0 0.0
    %834 = vmatprep.subr.mxu0 0.0
    %835 = vmatpush2.msra.mxu0 0.0
    %836 = vmatprep.subr.mxu0 0.0
    %837 = vmatpush2.msra.mxu0 0.0
    %838 = vmatprep.subr.mxu0 0.0
    %839 = vmatpush2.msra.mxu0 0.0
    %840 = vmatprep.subr.mxu0 0.0
    %841 = vmatpush2.msra.mxu0 0.0
    %842 = vmatprep.subr.mxu0 0.0
    %843 = vmatpush2.msra.mxu0 0.0
    %844 = vmatprep.mubr.f32.mxu0 0.0
    %845 = vmatmul.mubr.f32.gmra.mxu0 %v707
    %v846 = vpop.f32.mrf.mxu0
    %v847 = vadd.f32 0.0, %v846
    %v848 = vpop.f32.mrf.mxu0
    %849 = vdwg.mxu0
    %v850 = vadd.f32 %v116, %v847
    %v851 = vxor.u32 %v850, 2147483648
    %v852 = vmul.f32 %v851, 1.442695
    %v853 = vpow.pop %v852
    %v854 = vadd.f32 %v853, 1.0
    %v855 = vrcp.pop %v854
    %v856 = vmul.f32 1.0, %v855
    %v857 = vtanh.pop %v850
    %v859 = vrot.slane %v696, 6
    %v861 = vmul.f32 %v856, %v859
    %863 = vrot.lane.b32.xlu0 %v857, 64
    %v864 = vpop.permute.xlu0 %863
    %v866 = vmul.f32 %v856, %v864
    %868 = vrot.lane.b32.xlu0 %v866, 32
    %v869 = vpop.permute.xlu0 %868
    %v871 = vadd.f32 %v861, %v869
    %v872 = vtanh.pop %v871
    %874 = vrot.lane.b32.xlu0 %v872, 64
    %v875 = vpop.permute.xlu0 %874
    %v877 = vmul.f32 %v856, %v875
    %879 = vrot.lane.b32.xlu0 %v877, 32
    %v880 = vpop.permute.xlu0 %879
    %v881 = vsel %vm172, %v880, 0
    %883 = vmatprep.subr.mxu0 0.0
    %884 = vmatpush1.msra.mxu0 0.0
    %885 = vmatprep.subr.mxu0 0.0
    %886 = vmatpush1.msra.mxu0 0.0
    %887 = vmatprep.subr.mxu0 0.0
    %888 = vmatpush1.msra.mxu0 0.0
    %889 = vmatprep.subr.mxu0 0.0
    %890 = vmatpush1.msra.mxu0 0.0
    %891 = vmatprep.subr.mxu0 0.0
    %892 = vmatpush1.msra.mxu0 0.0
    %893 = vmatprep.subr.mxu0 0.0
    %894 = vmatpush1.msra.mxu0 0.0
    %895 = vmatprep.subr.mxu0 0.0
    %896 = vmatpush1.msra.mxu0 0.0
    %897 = vmatprep.subr.mxu0 0.0
    %898 = vmatpush1.msra.mxu0 0.0
    %899 = vmatprep.subr.mxu0 0.0
    %900 = vmatpush1.msra.mxu0 0.0
    %901 = vmatprep.subr.mxu0 0.0
    %902 = vmatpush1.msra.mxu0 0.0
    %903 = vmatprep.subr.mxu0 0.0
    %904 = vmatpush1.msra.mxu0 0.0
    %905 = vmatprep.subr.mxu0 0.0
    %906 = vmatpush1.msra.mxu0 0.0
    %907 = vmatprep.subr.mxu0 0.0
    %908 = vmatpush1.msra.mxu0 %v138
    %909 = vmatprep.subr.mxu0 0.0
    %910 = vmatpush1.msra.mxu0 %v137
    %911 = vmatprep.subr.mxu0 0.0
    %912 = vmatpush1.msra.mxu0 %v136
    %913 = vmatprep.subr.mxu0 0.0
    %914 = vmatpush1.msra.mxu0 %v135
    %915 = vmatprep.subr.mxu0 0.0
    %916 = vmatpush2.msra.mxu0 0.0
    %917 = vmatprep.subr.mxu0 0.0
    %918 = vmatpush2.msra.mxu0 0.0
    %919 = vmatprep.subr.mxu0 0.0
    %920 = vmatpush2.msra.mxu0 0.0
    %921 = vmatprep.subr.mxu0 0.0
    %922 = vmatpush2.msra.mxu0 0.0
    %923 = vmatprep.subr.mxu0 0.0
    %924 = vmatpush2.msra.mxu0 0.0
    %925 = vmatprep.subr.mxu0 0.0
    %926 = vmatpush2.msra.mxu0 0.0
    %927 = vmatprep.subr.mxu0 0.0
    %928 = vmatpush2.msra.mxu0 0.0
    %929 = vmatprep.subr.mxu0 0.0
    %930 = vmatpush2.msra.mxu0 0.0
    %931 = vmatprep.subr.mxu0 0.0
    %932 = vmatpush2.msra.mxu0 0.0
    %933 = vmatprep.subr.mxu0 0.0
    %934 = vmatpush2.msra.mxu0 0.0
    %935 = vmatprep.subr.mxu0 0.0
    %936 = vmatpush2.msra.mxu0 0.0
    %937 = vmatprep.subr.mxu0 0.0
    %938 = vmatpush2.msra.mxu0 0.0
    %939 = vmatprep.subr.mxu0 0.0
    %940 = vmatpush2.msra.mxu0 0.0
    %941 = vmatprep.subr.mxu0 0.0
    %942 = vmatpush2.msra.mxu0 0.0
    %943 = vmatprep.subr.mxu0 0.0
    %944 = vmatpush2.msra.mxu0 0.0
    %945 = vmatprep.subr.mxu0 0.0
    %946 = vmatpush2.msra.mxu0 0.0
    %947 = vmatprep.mubr.f32.mxu0 0.0
    %948 = vmatmul.mubr.f32.gmra.mxu0 %v881
    %v949 = vpop.f32.mrf.mxu0
    %v950 = vadd.f32 0.0, %v949
    %v951 = vpop.f32.mrf.mxu0
    %952 = vdwg.mxu0
    %v953 = vadd.f32 %v779, %v950
    %954 = vmatprep.subr.mxu0 0.0
    %955 = vmatpush1.msra.mxu0 0.0
    %956 = vmatprep.subr.mxu0 0.0
    %957 = vmatpush1.msra.mxu0 0.0
    %958 = vmatprep.subr.mxu0 0.0
    %959 = vmatpush1.msra.mxu0 0.0
    %960 = vmatprep.subr.mxu0 0.0
    %961 = vmatpush1.msra.mxu0 0.0
    %962 = vmatprep.subr.mxu0 0.0
    %963 = vmatpush1.msra.mxu0 0.0
    %964 = vmatprep.subr.mxu0 0.0
    %965 = vmatpush1.msra.mxu0 0.0
    %966 = vmatprep.subr.mxu0 0.0
    %967 = vmatpush1.msra.mxu0 0.0
    %968 = vmatprep.subr.mxu0 0.0
    %969 = vmatpush1.msra.mxu0 0.0
    %970 = vmatprep.subr.mxu0 0.0
    %971 = vmatpush1.msra.mxu0 0.0
    %972 = vmatprep.subr.mxu0 0.0
    %973 = vmatpush1.msra.mxu0 0.0
    %974 = vmatprep.subr.mxu0 0.0
    %975 = vmatpush1.msra.mxu0 0.0
    %976 = vmatprep.subr.mxu0 0.0
    %977 = vmatpush1.msra.mxu0 0.0
    %978 = vmatprep.subr.mxu0 0.0
    %979 = vmatpush1.msra.mxu0 %v25
    %980 = vmatprep.subr.mxu0 0.0
    %981 = vmatpush1.msra.mxu0 %v24
    %982 = vmatprep.subr.mxu0 0.0
    %983 = vmatpush1.msra.mxu0 %v23
    %984 = vmatprep.subr.mxu0 0.0
    %985 = vmatpush1.msra.mxu0 %v22
    %986 = vmatprep.subr.mxu0 0.0
    %987 = vmatpush2.msra.mxu0 0.0
    %988 = vmatprep.subr.mxu0 0.0
    %989 = vmatpush2.msra.mxu0 0.0
    %990 = vmatprep.subr.mxu0 0.0
    %991 = vmatpush2.msra.mxu0 0.0
    %992 = vmatprep.subr.mxu0 0.0
    %993 = vmatpush2.msra.mxu0 0.0
    %994 = vmatprep.subr.mxu0 0.0
    %995 = vmatpush2.msra.mxu0 0.0
    %996 = vmatprep.subr.mxu0 0.0
    %997 = vmatpush2.msra.mxu0 0.0
    %998 = vmatprep.subr.mxu0 0.0
    %999 = vmatpush2.msra.mxu0 0.0
    %1000 = vmatprep.subr.mxu0 0.0
    %1001 = vmatpush2.msra.mxu0 0.0
    %1002 = vmatprep.subr.mxu0 0.0
    %1003 = vmatpush2.msra.mxu0 0.0
    %1004 = vmatprep.subr.mxu0 0.0
    %1005 = vmatpush2.msra.mxu0 0.0
    %1006 = vmatprep.subr.mxu0 0.0
    %1007 = vmatpush2.msra.mxu0 0.0
    %1008 = vmatprep.subr.mxu0 0.0
    %1009 = vmatpush2.msra.mxu0 0.0
    %1010 = vmatprep.subr.mxu0 0.0
    %1011 = vmatpush2.msra.mxu0 0.0
    %1012 = vmatprep.subr.mxu0 0.0
    %1013 = vmatpush2.msra.mxu0 0.0
    %1014 = vmatprep.subr.mxu0 0.0
    %1015 = vmatpush2.msra.mxu0 0.0
    %1016 = vmatprep.subr.mxu0 0.0
    %1017 = vmatpush2.msra.mxu0 0.0
    %1018 = vmatprep.mubr.f32.mxu0 0.0
    %1019 = vmatmul.mubr.f32.gmra.mxu0 %v881
    %v1020 = vpop.f32.mrf.mxu0
    %v1021 = vadd.f32 0.0, %v1020
    %v1022 = vpop.f32.mrf.mxu0
    %1023 = vdwg.mxu0
    %v1025 = vrot.slane %v1021, 6
    %v1027 = vadd.f32 %v116, %v1025
    %v1028 = vxor.u32 %v1027, 2147483648
    %v1029 = vmul.f32 %v1028, 1.442695
    %v1030 = vpow.pop %v1029
    %v1031 = vadd.f32 %v1030, 1.0
    %v1032 = vrcp.pop %v1031
    %v1033 = vmul.f32 1.0, %v1032
    %v1034 = vtanh.pop %v1027
    %v1036 = vrot.slane %v871, 6
    %v1038 = vmul.f32 %v1033, %v1036
    %1040 = vrot.lane.b32.xlu0 %v1034, 64
    %v1041 = vpop.permute.xlu0 %1040
    %v1043 = vmul.f32 %v1033, %v1041
    %1045 = vrot.lane.b32.xlu0 %v1043, 32
    %v1046 = vpop.permute.xlu0 %1045
    %v1048 = vadd.f32 %v1038, %v1046
    %v1049 = vtanh.pop %v1048
    %1051 = vrot.lane.b32.xlu0 %v1049, 64
    %v1052 = vpop.permute.xlu0 %1051
    %v1054 = vmul.f32 %v1033, %v1052
    %v1056 = vrot.slane %v1054, 2
    %1057 = vrot.lane.b32.xlu0 %v1056, 32
    %v1058 = vpop.permute.xlu0 %1057
    %v1059 = vsel %vm172, %v1058, 0
    %1061 = vmatprep.subr.mxu0 0.0
    %1062 = vmatpush1.msra.mxu0 0.0
    %1063 = vmatprep.subr.mxu0 0.0
    %1064 = vmatpush1.msra.mxu0 0.0
    %1065 = vmatprep.subr.mxu0 0.0
    %1066 = vmatpush1.msra.mxu0 0.0
    %1067 = vmatprep.subr.mxu0 0.0
    %1068 = vmatpush1.msra.mxu0 0.0
    %1069 = vmatprep.subr.mxu0 0.0
    %1070 = vmatpush1.msra.mxu0 0.0
    %1071 = vmatprep.subr.mxu0 0.0
    %1072 = vmatpush1.msra.mxu0 0.0
    %1073 = vmatprep.subr.mxu0 0.0
    %1074 = vmatpush1.msra.mxu0 0.0
    %1075 = vmatprep.subr.mxu0 0.0
    %1076 = vmatpush1.msra.mxu0 0.0
    %1077 = vmatprep.subr.mxu0 0.0
    %1078 = vmatpush1.msra.mxu0 0.0
    %1079 = vmatprep.subr.mxu0 0.0
    %1080 = vmatpush1.msra.mxu0 0.0
    %1081 = vmatprep.subr.mxu0 0.0
    %1082 = vmatpush1.msra.mxu0 0.0
    %1083 = vmatprep.subr.mxu0 0.0
    %1084 = vmatpush1.msra.mxu0 0.0
    %1085 = vmatprep.subr.mxu0 0.0
    %1086 = vmatpush1.msra.mxu0 %v142
    %1087 = vmatprep.subr.mxu0 0.0
    %1088 = vmatpush1.msra.mxu0 %v141
    %1089 = vmatprep.subr.mxu0 0.0
    %1090 = vmatpush1.msra.mxu0 %v140
    %1091 = vmatprep.subr.mxu0 0.0
    %1092 = vmatpush1.msra.mxu0 %v139
    %1093 = vmatprep.subr.mxu0 0.0
    %1094 = vmatpush2.msra.mxu0 0.0
    %1095 = vmatprep.subr.mxu0 0.0
    %1096 = vmatpush2.msra.mxu0 0.0
    %1097 = vmatprep.subr.mxu0 0.0
    %1098 = vmatpush2.msra.mxu0 0.0
    %1099 = vmatprep.subr.mxu0 0.0
    %1100 = vmatpush2.msra.mxu0 0.0
    %1101 = vmatprep.subr.mxu0 0.0
    %1102 = vmatpush2.msra.mxu0 0.0
    %1103 = vmatprep.subr.mxu0 0.0
    %1104 = vmatpush2.msra.mxu0 0.0
    %1105 = vmatprep.subr.mxu0 0.0
    %1106 = vmatpush2.msra.mxu0 0.0
    %1107 = vmatprep.subr.mxu0 0.0
    %1108 = vmatpush2.msra.mxu0 0.0
    %1109 = vmatprep.subr.mxu0 0.0
    %1110 = vmatpush2.msra.mxu0 0.0
    %1111 = vmatprep.subr.mxu0 0.0
    %1112 = vmatpush2.msra.mxu0 0.0
    %1113 = vmatprep.subr.mxu0 0.0
    %1114 = vmatpush2.msra.mxu0 0.0
    %1115 = vmatprep.subr.mxu0 0.0
    %1116 = vmatpush2.msra.mxu0 0.0
    %1117 = vmatprep.subr.mxu0 0.0
    %1118 = vmatpush2.msra.mxu0 0.0
    %1119 = vmatprep.subr.mxu0 0.0
    %1120 = vmatpush2.msra.mxu0 0.0
    %1121 = vmatprep.subr.mxu0 0.0
    %1122 = vmatpush2.msra.mxu0 0.0
    %1123 = vmatprep.subr.mxu0 0.0
    %1124 = vmatpush2.msra.mxu0 0.0
    %1125 = vmatprep.mubr.f32.mxu0 0.0
    %1126 = vmatmul.mubr.f32.gmra.mxu0 %v1059
    %v1127 = vpop.f32.mrf.mxu0
    %v1128 = vadd.f32 0.0, %v1127
    %v1129 = vpop.f32.mrf.mxu0
    %1130 = vdwg.mxu0
    %v1131 = vadd.f32 %v953, %v1128
    %1132 = vmatprep.subr.mxu0 0.0
    %1133 = vmatpush1.msra.mxu0 0.0
    %1134 = vmatprep.subr.mxu0 0.0
    %1135 = vmatpush1.msra.mxu0 0.0
    %1136 = vmatprep.subr.mxu0 0.0
    %1137 = vmatpush1.msra.mxu0 0.0
    %1138 = vmatprep.subr.mxu0 0.0
    %1139 = vmatpush1.msra.mxu0 0.0
    %1140 = vmatprep.subr.mxu0 0.0
    %1141 = vmatpush1.msra.mxu0 0.0
    %1142 = vmatprep.subr.mxu0 0.0
    %1143 = vmatpush1.msra.mxu0 0.0
    %1144 = vmatprep.subr.mxu0 0.0
    %1145 = vmatpush1.msra.mxu0 0.0
    %1146 = vmatprep.subr.mxu0 0.0
    %1147 = vmatpush1.msra.mxu0 0.0
    %1148 = vmatprep.subr.mxu0 0.0
    %1149 = vmatpush1.msra.mxu0 0.0
    %1150 = vmatprep.subr.mxu0 0.0
    %1151 = vmatpush1.msra.mxu0 0.0
    %1152 = vmatprep.subr.mxu0 0.0
    %1153 = vmatpush1.msra.mxu0 0.0
    %1154 = vmatprep.subr.mxu0 0.0
    %1155 = vmatpush1.msra.mxu0 0.0
    %1156 = vmatprep.subr.mxu0 0.0
    %1157 = vmatpush1.msra.mxu0 %v25
    %1158 = vmatprep.subr.mxu0 0.0
    %1159 = vmatpush1.msra.mxu0 %v24
    %1160 = vmatprep.subr.mxu0 0.0
    %1161 = vmatpush1.msra.mxu0 %v23
    %1162 = vmatprep.subr.mxu0 0.0
    %1163 = vmatpush1.msra.mxu0 %v22
    %1164 = vmatprep.subr.mxu0 0.0
    %1165 = vmatpush2.msra.mxu0 0.0
    %1166 = vmatprep.subr.mxu0 0.0
    %1167 = vmatpush2.msra.mxu0 0.0
    %1168 = vmatprep.subr.mxu0 0.0
    %1169 = vmatpush2.msra.mxu0 0.0
    %1170 = vmatprep.subr.mxu0 0.0
    %1171 = vmatpush2.msra.mxu0 0.0
    %1172 = vmatprep.subr.mxu0 0.0
    %1173 = vmatpush2.msra.mxu0 0.0
    %1174 = vmatprep.subr.mxu0 0.0
    %1175 = vmatpush2.msra.mxu0 0.0
    %1176 = vmatprep.subr.mxu0 0.0
    %1177 = vmatpush2.msra.mxu0 0.0
    %1178 = vmatprep.subr.mxu0 0.0
    %1179 = vmatpush2.msra.mxu0 0.0
    %1180 = vmatprep.subr.mxu0 0.0
    %1181 = vmatpush2.msra.mxu0 0.0
    %1182 = vmatprep.subr.mxu0 0.0
    %1183 = vmatpush2.msra.mxu0 0.0
    %1184 = vmatprep.subr.mxu0 0.0
    %1185 = vmatpush2.msra.mxu0 0.0
    %1186 = vmatprep.subr.mxu0 0.0
    %1187 = vmatpush2.msra.mxu0 0.0
    %1188 = vmatprep.subr.mxu0 0.0
    %1189 = vmatpush2.msra.mxu0 0.0
    %1190 = vmatprep.subr.mxu0 0.0
    %1191 = vmatpush2.msra.mxu0 0.0
    %1192 = vmatprep.subr.mxu0 0.0
    %1193 = vmatpush2.msra.mxu0 0.0
    %1194 = vmatprep.subr.mxu0 0.0
    %1195 = vmatpush2.msra.mxu0 0.0
    %1196 = vmatprep.mubr.f32.mxu0 0.0
    %1197 = vmatmul.mubr.f32.gmra.mxu0 %v1059
    %v1198 = vpop.f32.mrf.mxu0
    %v1199 = vadd.f32 0.0, %v1198
    %v1200 = vpop.f32.mrf.mxu0
    %1201 = vdwg.mxu0
    %v1203 = vrot.slane %v1199, 4
    %v1205 = vadd.f32 %v116, %v1203
    %v1206 = vxor.u32 %v1205, 2147483648
    %v1207 = vmul.f32 %v1206, 1.442695
    %v1208 = vpow.pop %v1207
    %v1209 = vadd.f32 %v1208, 1.0
    %v1210 = vrcp.pop %v1209
    %v1211 = vmul.f32 1.0, %v1210
    %v1212 = vtanh.pop %v1205
    %v1214 = vrot.slane %v1048, 6
    %v1216 = vmul.f32 %v1211, %v1214
    %1218 = vrot.lane.b32.xlu0 %v1212, 64
    %v1219 = vpop.permute.xlu0 %1218
    %v1221 = vmul.f32 %v1211, %v1219
    %1223 = vrot.lane.b32.xlu0 %v1221, 32
    %v1224 = vpop.permute.xlu0 %1223
    %v1226 = vadd.f32 %v1216, %v1224
    %v1227 = vtanh.pop %v1226
    %1229 = vrot.lane.b32.xlu0 %v1227, 64
    %v1230 = vpop.permute.xlu0 %1229
    %v1232 = vmul.f32 %v1211, %v1230
    %v1234 = vrot.slane %v1232, 4
    %1235 = vrot.lane.b32.xlu0 %v1234, 32
    %v1236 = vpop.permute.xlu0 %1235
    %v1237 = vsel %vm172, %v1236, 0
    %1239 = vmatprep.subr.mxu0 0.0
    %1240 = vmatpush1.msra.mxu0 0.0
    %1241 = vmatprep.subr.mxu0 0.0
    %1242 = vmatpush1.msra.mxu0 0.0
    %1243 = vmatprep.subr.mxu0 0.0
    %1244 = vmatpush1.msra.mxu0 0.0
    %1245 = vmatprep.subr.mxu0 0.0
    %1246 = vmatpush1.msra.mxu0 0.0
    %1247 = vmatprep.subr.mxu0 0.0
    %1248 = vmatpush1.msra.mxu0 0.0
    %1249 = vmatprep.subr.mxu0 0.0
    %1250 = vmatpush1.msra.mxu0 0.0
    %1251 = vmatprep.subr.mxu0 0.0
    %1252 = vmatpush1.msra.mxu0 0.0
    %1253 = vmatprep.subr.mxu0 0.0
    %1254 = vmatpush1.msra.mxu0 0.0
    %1255 = vmatprep.subr.mxu0 0.0
    %1256 = vmatpush1.msra.mxu0 0.0
    %1257 = vmatprep.subr.mxu0 0.0
    %1258 = vmatpush1.msra.mxu0 0.0
    %1259 = vmatprep.subr.mxu0 0.0
    %1260 = vmatpush1.msra.mxu0 0.0
    %1261 = vmatprep.subr.mxu0 0.0
    %1262 = vmatpush1.msra.mxu0 0.0
    %1263 = vmatprep.subr.mxu0 0.0
    %1264 = vmatpush1.msra.mxu0 %v146
    %1265 = vmatprep.subr.mxu0 0.0
    %1266 = vmatpush1.msra.mxu0 %v145
    %1267 = vmatprep.subr.mxu0 0.0
    %1268 = vmatpush1.msra.mxu0 %v144
    %1269 = vmatprep.subr.mxu0 0.0
    %1270 = vmatpush1.msra.mxu0 %v143
    %1271 = vmatprep.subr.mxu0 0.0
    %1272 = vmatpush2.msra.mxu0 0.0
    %1273 = vmatprep.subr.mxu0 0.0
    %1274 = vmatpush2.msra.mxu0 0.0
    %1275 = vmatprep.subr.mxu0 0.0
    %1276 = vmatpush2.msra.mxu0 0.0
    %1277 = vmatprep.subr.mxu0 0.0
    %1278 = vmatpush2.msra.mxu0 0.0
    %1279 = vmatprep.subr.mxu0 0.0
    %1280 = vmatpush2.msra.mxu0 0.0
    %1281 = vmatprep.subr.mxu0 0.0
    %1282 = vmatpush2.msra.mxu0 0.0
    %1283 = vmatprep.subr.mxu0 0.0
    %1284 = vmatpush2.msra.mxu0 0.0
    %1285 = vmatprep.subr.mxu0 0.0
    %1286 = vmatpush2.msra.mxu0 0.0
    %1287 = vmatprep.subr.mxu0 0.0
    %1288 = vmatpush2.msra.mxu0 0.0
    %1289 = vmatprep.subr.mxu0 0.0
    %1290 = vmatpush2.msra.mxu0 0.0
    %1291 = vmatprep.subr.mxu0 0.0
    %1292 = vmatpush2.msra.mxu0 0.0
    %1293 = vmatprep.subr.mxu0 0.0
    %1294 = vmatpush2.msra.mxu0 0.0
    %1295 = vmatprep.subr.mxu0 0.0
    %1296 = vmatpush2.msra.mxu0 0.0
    %1297 = vmatprep.subr.mxu0 0.0
    %1298 = vmatpush2.msra.mxu0 0.0
    %1299 = vmatprep.subr.mxu0 0.0
    %1300 = vmatpush2.msra.mxu0 0.0
    %1301 = vmatprep.subr.mxu0 0.0
    %1302 = vmatpush2.msra.mxu0 0.0
    %1303 = vmatprep.mubr.f32.mxu0 0.0
    %1304 = vmatmul.mubr.f32.gmra.mxu0 %v1237
    %v1305 = vpop.f32.mrf.mxu0
    %v1306 = vadd.f32 0.0, %v1305
    %v1307 = vpop.f32.mrf.mxu0
    %1308 = vdwg.mxu0
    %v1309 = vadd.f32 %v1131, %v1306
    %1310 = vmatprep.subr.mxu0 0.0
    %1311 = vmatpush1.msra.mxu0 0.0
    %1312 = vmatprep.subr.mxu0 0.0
    %1313 = vmatpush1.msra.mxu0 0.0
    %1314 = vmatprep.subr.mxu0 0.0
    %1315 = vmatpush1.msra.mxu0 0.0
    %1316 = vmatprep.subr.mxu0 0.0
    %1317 = vmatpush1.msra.mxu0 0.0
    %1318 = vmatprep.subr.mxu0 0.0
    %1319 = vmatpush1.msra.mxu0 0.0
    %1320 = vmatprep.subr.mxu0 0.0
    %1321 = vmatpush1.msra.mxu0 0.0
    %1322 = vmatprep.subr.mxu0 0.0
    %1323 = vmatpush1.msra.mxu0 0.0
    %1324 = vmatprep.subr.mxu0 0.0
    %1325 = vmatpush1.msra.mxu0 0.0
    %1326 = vmatprep.subr.mxu0 0.0
    %1327 = vmatpush1.msra.mxu0 0.0
    %1328 = vmatprep.subr.mxu0 0.0
    %1329 = vmatpush1.msra.mxu0 0.0
    %1330 = vmatprep.subr.mxu0 0.0
    %1331 = vmatpush1.msra.mxu0 0.0
    %1332 = vmatprep.subr.mxu0 0.0
    %1333 = vmatpush1.msra.mxu0 0.0
    %1334 = vmatprep.subr.mxu0 0.0
    %1335 = vmatpush1.msra.mxu0 %v25
    %1336 = vmatprep.subr.mxu0 0.0
    %1337 = vmatpush1.msra.mxu0 %v24
    %1338 = vmatprep.subr.mxu0 0.0
    %1339 = vmatpush1.msra.mxu0 %v23
    %1340 = vmatprep.subr.mxu0 0.0
    %1341 = vmatpush1.msra.mxu0 %v22
    %1342 = vmatprep.subr.mxu0 0.0
    %1343 = vmatpush2.msra.mxu0 0.0
    %1344 = vmatprep.subr.mxu0 0.0
    %1345 = vmatpush2.msra.mxu0 0.0
    %1346 = vmatprep.subr.mxu0 0.0
    %1347 = vmatpush2.msra.mxu0 0.0
    %1348 = vmatprep.subr.mxu0 0.0
    %1349 = vmatpush2.msra.mxu0 0.0
    %1350 = vmatprep.subr.mxu0 0.0
    %1351 = vmatpush2.msra.mxu0 0.0
    %1352 = vmatprep.subr.mxu0 0.0
    %1353 = vmatpush2.msra.mxu0 0.0
    %1354 = vmatprep.subr.mxu0 0.0
    %1355 = vmatpush2.msra.mxu0 0.0
    %1356 = vmatprep.subr.mxu0 0.0
    %1357 = vmatpush2.msra.mxu0 0.0
    %1358 = vmatprep.subr.mxu0 0.0
    %1359 = vmatpush2.msra.mxu0 0.0
    %1360 = vmatprep.subr.mxu0 0.0
    %1361 = vmatpush2.msra.mxu0 0.0
    %1362 = vmatprep.subr.mxu0 0.0
    %1363 = vmatpush2.msra.mxu0 0.0
    %1364 = vmatprep.subr.mxu0 0.0
    %1365 = vmatpush2.msra.mxu0 0.0
    %1366 = vmatprep.subr.mxu0 0.0
    %1367 = vmatpush2.msra.mxu0 0.0
    %1368 = vmatprep.subr.mxu0 0.0
    %1369 = vmatpush2.msra.mxu0 0.0
    %1370 = vmatprep.subr.mxu0 0.0
    %1371 = vmatpush2.msra.mxu0 0.0
    %1372 = vmatprep.subr.mxu0 0.0
    %1373 = vmatpush2.msra.mxu0 0.0
    %1374 = vmatprep.mubr.f32.mxu0 0.0
    %1375 = vmatmul.mubr.f32.gmra.mxu0 %v1237
    %v1376 = vpop.f32.mrf.mxu0
    %v1377 = vadd.f32 0.0, %v1376
    %v1378 = vpop.f32.mrf.mxu0
    %1379 = vdwg.mxu0
    %v1381 = vrot.slane %v1377, 2
    %v1383 = vadd.f32 %v116, %v1381
    %v1384 = vxor.u32 %v1383, 2147483648
    %v1385 = vmul.f32 %v1384, 1.442695
    %v1386 = vpow.pop %v1385
    %v1387 = vadd.f32 %v1386, 1.0
    %v1388 = vrcp.pop %v1387
    %v1389 = vmul.f32 1.0, %v1388
    %v1390 = vtanh.pop %v1383
    %v1392 = vrot.slane %v1226, 6
    %v1394 = vmul.f32 %v1389, %v1392
    %1396 = vrot.lane.b32.xlu0 %v1390, 64
    %v1397 = vpop.permute.xlu0 %1396
    %v1399 = vmul.f32 %v1389, %v1397
    %1401 = vrot.lane.b32.xlu0 %v1399, 32
    %v1402 = vpop.permute.xlu0 %1401
    %v1404 = vadd.f32 %v1394, %v1402
    %v1405 = vtanh.pop %v1404
    %1407 = vrot.lane.b32.xlu0 %v1405, 64
    %v1408 = vpop.permute.xlu0 %1407
    %v1410 = vmul.f32 %v1389, %v1408
    %v1412 = vrot.slane %v1410, 6
    %1413 = vrot.lane.b32.xlu0 %v1412, 32
    %v1414 = vpop.permute.xlu0 %1413
    %v1415 = vsel %vm172, %v1414, 0
    %1417 = vmatprep.subr.mxu0 0.0
    %1418 = vmatpush1.msra.mxu0 0.0
    %1419 = vmatprep.subr.mxu0 0.0
    %1420 = vmatpush1.msra.mxu0 0.0
    %1421 = vmatprep.subr.mxu0 0.0
    %1422 = vmatpush1.msra.mxu0 0.0
    %1423 = vmatprep.subr.mxu0 0.0
    %1424 = vmatpush1.msra.mxu0 0.0
    %1425 = vmatprep.subr.mxu0 0.0
    %1426 = vmatpush1.msra.mxu0 0.0
    %1427 = vmatprep.subr.mxu0 0.0
    %1428 = vmatpush1.msra.mxu0 0.0
    %1429 = vmatprep.subr.mxu0 0.0
    %1430 = vmatpush1.msra.mxu0 0.0
    %1431 = vmatprep.subr.mxu0 0.0
    %1432 = vmatpush1.msra.mxu0 0.0
    %1433 = vmatprep.subr.mxu0 0.0
    %1434 = vmatpush1.msra.mxu0 0.0
    %1435 = vmatprep.subr.mxu0 0.0
    %1436 = vmatpush1.msra.mxu0 0.0
    %1437 = vmatprep.subr.mxu0 0.0
    %1438 = vmatpush1.msra.mxu0 0.0
    %1439 = vmatprep.subr.mxu0 0.0
    %1440 = vmatpush1.msra.mxu0 0.0
    %1441 = vmatprep.subr.mxu0 0.0
    %1442 = vmatpush1.msra.mxu0 %v150
    %1443 = vmatprep.subr.mxu0 0.0
    %1444 = vmatpush1.msra.mxu0 %v149
    %1445 = vmatprep.subr.mxu0 0.0
    %1446 = vmatpush1.msra.mxu0 %v148
    %1447 = vmatprep.subr.mxu0 0.0
    %1448 = vmatpush1.msra.mxu0 %v147
    %1449 = vmatprep.subr.mxu0 0.0
    %1450 = vmatpush2.msra.mxu0 0.0
    %1451 = vmatprep.subr.mxu0 0.0
    %1452 = vmatpush2.msra.mxu0 0.0
    %1453 = vmatprep.subr.mxu0 0.0
    %1454 = vmatpush2.msra.mxu0 0.0
    %1455 = vmatprep.subr.mxu0 0.0
    %1456 = vmatpush2.msra.mxu0 0.0
    %1457 = vmatprep.subr.mxu0 0.0
    %1458 = vmatpush2.msra.mxu0 0.0
    %1459 = vmatprep.subr.mxu0 0.0
    %1460 = vmatpush2.msra.mxu0 0.0
    %1461 = vmatprep.subr.mxu0 0.0
    %1462 = vmatpush2.msra.mxu0 0.0
    %1463 = vmatprep.subr.mxu0 0.0
    %1464 = vmatpush2.msra.mxu0 0.0
    %1465 = vmatprep.subr.mxu0 0.0
    %1466 = vmatpush2.msra.mxu0 0.0
    %1467 = vmatprep.subr.mxu0 0.0
    %1468 = vmatpush2.msra.mxu0 0.0
    %1469 = vmatprep.subr.mxu0 0.0
    %1470 = vmatpush2.msra.mxu0 0.0
    %1471 = vmatprep.subr.mxu0 0.0
    %1472 = vmatpush2.msra.mxu0 0.0
    %1473 = vmatprep.subr.mxu0 0.0
    %1474 = vmatpush2.msra.mxu0 0.0
    %1475 = vmatprep.subr.mxu0 0.0
    %1476 = vmatpush2.msra.mxu0 0.0
    %1477 = vmatprep.subr.mxu0 0.0
    %1478 = vmatpush2.msra.mxu0 0.0
    %1479 = vmatprep.subr.mxu0 0.0
    %1480 = vmatpush2.msra.mxu0 0.0
    %1481 = vmatprep.mubr.f32.mxu0 0.0
    %1482 = vmatmul.mubr.f32.gmra.mxu0 %v1415
    %v1483 = vpop.f32.mrf.mxu0
    %v1484 = vadd.f32 0.0, %v1483
    %v1485 = vpop.f32.mrf.mxu0
    %1486 = vdwg.mxu0
    %v1487 = vadd.f32 %v1309, %v1484
    %v1489 = vlaneseq
    %v1490 = vshrl.u32 %v1489, 7
    %v1491 = vsub.s32 0, %v1490
    %v1492 = vrot.slane %v27, %v1491
    %v1494 = vadd.f32 %v1487, %v1492
    %v1495 = vmax.f32 %v1494, 0.0
    %v1496 = vld [vmem:[%s3] sm:$0xff]
    %v1497 = vld [vmem:[%s3 + $0x8] sm:$0xff]
    %v1498 = vld [vmem:[%s3 + $0x10] sm:$0xff]
    %v1499 = vld [vmem:[%s3 + $0x18] sm:$0xff]
    %v1501 = vlaneseq
    %v1502 = vshrl.u32 %v1501, 7
    %v1503 = vsub.s32 0, %v1502
    %v1504 = vrot.slane %v28, %v1503
    %v1507 = vsel %vm172, %v1495, 0
    %1509 = vmatprep.subr.mxu0 0.0
    %1510 = vmatpush1.msra.mxu0 0.0
    %1511 = vmatprep.subr.mxu0 0.0
    %1512 = vmatpush1.msra.mxu0 0.0
    %1513 = vmatprep.subr.mxu0 0.0
    %1514 = vmatpush1.msra.mxu0 0.0
    %1515 = vmatprep.subr.mxu0 0.0
    %1516 = vmatpush1.msra.mxu0 0.0
    %1517 = vmatprep.subr.mxu0 0.0
    %1518 = vmatpush1.msra.mxu0 0.0
    %1519 = vmatprep.subr.mxu0 0.0
    %1520 = vmatpush1.msra.mxu0 0.0
    %1521 = vmatprep.subr.mxu0 0.0
    %1522 = vmatpush1.msra.mxu0 0.0
    %1523 = vmatprep.subr.mxu0 0.0
    %1524 = vmatpush1.msra.mxu0 0.0
    %1525 = vmatprep.subr.mxu0 0.0
    %1526 = vmatpush1.msra.mxu0 0.0
    %1527 = vmatprep.subr.mxu0 0.0
    %1528 = vmatpush1.msra.mxu0 0.0
    %1529 = vmatprep.subr.mxu0 0.0
    %1530 = vmatpush1.msra.mxu0 0.0
    %1531 = vmatprep.subr.mxu0 0.0
    %1532 = vmatpush1.msra.mxu0 0.0
    %1533 = vmatprep.subr.mxu0 0.0
    %1534 = vmatpush1.msra.mxu0 %v1499
    %1535 = vmatprep.subr.mxu0 0.0
    %1536 = vmatpush1.msra.mxu0 %v1498
    %1537 = vmatprep.subr.mxu0 0.0
    %1538 = vmatpush1.msra.mxu0 %v1497
    %1539 = vmatprep.subr.mxu0 0.0
    %1540 = vmatpush1.msra.mxu0 %v1496
    %1541 = vmatprep.subr.mxu0 0.0
    %1542 = vmatpush2.msra.mxu0 0.0
    %1543 = vmatprep.subr.mxu0 0.0
    %1544 = vmatpush2.msra.mxu0 0.0
    %1545 = vmatprep.subr.mxu0 0.0
    %1546 = vmatpush2.msra.mxu0 0.0
    %1547 = vmatprep.subr.mxu0 0.0
    %1548 = vmatpush2.msra.mxu0 0.0
    %1549 = vmatprep.subr.mxu0 0.0
    %1550 = vmatpush2.msra.mxu0 0.0
    %1551 = vmatprep.subr.mxu0 0.0
    %1552 = vmatpush2.msra.mxu0 0.0
    %1553 = vmatprep.subr.mxu0 0.0
    %1554 = vmatpush2.msra.mxu0 0.0
    %1555 = vmatprep.subr.mxu0 0.0
    %1556 = vmatpush2.msra.mxu0 0.0
    %1557 = vmatprep.subr.mxu0 0.0
    %1558 = vmatpush2.msra.mxu0 0.0
    %1559 = vmatprep.subr.mxu0 0.0
    %1560 = vmatpush2.msra.mxu0 0.0
    %1561 = vmatprep.subr.mxu0 0.0
    %1562 = vmatpush2.msra.mxu0 0.0
    %1563 = vmatprep.subr.mxu0 0.0
    %1564 = vmatpush2.msra.mxu0 0.0
    %1565 = vmatprep.subr.mxu0 0.0
    %1566 = vmatpush2.msra.mxu0 0.0
    %1567 = vmatprep.subr.mxu0 0.0
    %1568 = vmatpush2.msra.mxu0 0.0
    %1569 = vmatprep.subr.mxu0 0.0
    %1570 = vmatpush2.msra.mxu0 0.0
    %1571 = vmatprep.subr.mxu0 0.0
    %1572 = vmatpush2.msra.mxu0 0.0
    %1573 = vmatprep.mubr.f32.mxu0 0.0
    %1574 = vmatmul.mubr.f32.gmra.mxu0 %v1507
    %v1575 = vpop.f32.mrf.mxu0
    %v1576 = vadd.f32 %v1504, %v1575
    %v1577 = vpop.f32.mrf.mxu0
    %1578 = vdwg.mxu0
    %1579 = vst [vmem:[#allocation2] sm:$0x3] %v1576
    // Predicated region
    $region22: #{tpu_custom_call.1} parent=1 // pred_check
      _
    $region23: #{tpu_custom_call.1} parent=1 // pred_check_branch
      %1581 = sbr.rel (0) target = $region25
    $region24: #{tpu_custom_call.1} parent=1 // pred_region
      %s1583 = ssub.s32 32, 32
      %1584 = vsyncadd [#allocation3], %s1583
      %s1586 = sshll.u32 [#allocation2], 4
      %s1587 = int_to_ptr.vmem [resolvable:$true] %s1586
      %1589 = dma.vmem_to_hbm [thread:$0]  %s1587, 32, %s5, [#allocation3]
    $region25: #{tpu_custom_call.1} parent=1 // pred_fallthru
      _
    // Predicated region
    $region26: #{tpu_custom_call.1} parent=1 // pred_check
      _
    $region27: #{tpu_custom_call.1} parent=1 // pred_check_branch
      %1591 = sbr.rel (0) target = $region29
    $region28: #{tpu_custom_call.1} parent=1 // pred_region
      %1592 = dma.done [#allocation3], 32
    $region29: #{tpu_custom_call.1} parent=1 // pred_fallthru
      _
    %1593 = vsyncpa [#allocation3], 1

</llo_original>
